<compile_context>
chip_gen: v7x
topology: tpu7x:2x2x1
jax: 0.10.0
libtpu: 0.0.40
codegen_flags: <defaults>
</compile_context>

<pallas_src>
import numpy as np
import jax
import jax.numpy as jnp
from jax.experimental import pallas as pl
from jax.experimental.pallas import tpu as pltpu

C = 64     # channels (fixed by the module)
NB = 4     # number of branches (x, y, z, a)
NH = 4     # ChannAtt bottleneck width == (4,1) conv kernel height
SPLIT = 2  # 2-way spatial split of the pass-1 reduction (v7x megacore)


# ---------------------------------------------------------------------------
# Hardware budget helpers
# ---------------------------------------------------------------------------
def _round_up(n, m):
    return ((n + m - 1) // m) * m


def _vmem_capacity_bytes():
    try:
        info = pltpu.get_tpu_info()
        for name in ("vmem_capacity_bytes", "vmem_bytes", "vmem_size_bytes"):
            v = getattr(info, name, None)
            if v:
                return int(v)
    except Exception:
        pass
    return 64 * 1024 * 1024            # v7x-safe fallback (v5e/v6e have 128 MiB)


def _vmem_budget():
    # Leave ~3/8 of physical VMEM for compiler scratch / pipeline slack:
    # ~40 MiB on a 64 MiB v7x part, ~80 MiB on 128 MiB v5e/v6e parts.
    return max(16 * 1024 * 1024, (_vmem_capacity_bytes() * 5) // 8)


# ---------------------------------------------------------------------------
# Shared attention math (Mosaic-safe: elementwise + reductions + 2-D iota).
# Used both inside the fused kernel and, vmapped, as host glue for the
# two-pass path.
# ---------------------------------------------------------------------------
def _sigmoid(x):
    return 1.0 / (1.0 + jnp.exp(-x))


def _branch_weight_columns(m_cols, w1t, b1, w2, b2, cwt, cb):
    """ChannAtt bottleneck + (4,1) window conv + softmax*4 -> mixing weights.

    m_cols : list of NB (C, 1) per-branch per-channel spatial means (f32).
    w1t    : list of NB (C, NH)  first ChannAtt conv center taps, transposed.
    b1     : list of NB (1, NH)
    w2     : list of NB (C, NH)  second ChannAtt conv center taps.
    b2     : list of NB (C, 1)
    cwt    : list of NH (C, C)   (4,1) conv weight in (k, in, out) layout.
    cb     : (1, C)
    Returns list of NB (C, 1) weight columns (softmax over window pos, *4).
    """
    # ChannAtt per branch (3x3 convs see a 1x1 map with zero padding, so only
    # the center taps contribute).
    p_cols = []
    for i in range(NB):
        h = jnp.sum(w1t[i] * m_cols[i], axis=0, keepdims=True) + b1[i]     # (1, NH)
        h = jnp.maximum(h, 0.0)
        cha = _sigmoid(jnp.sum(w2[i] * h, axis=1, keepdims=True) + b2[i])  # (C, 1)
        p_cols.append(m_cols[i] * cha)                                     # (C, 1)

    # (4,1) conv over the circular window [p0,p1,p2,p3,p0,p1,p2]:
    #   logits[h, o] = sum_{k,i} conv_w[o,i,k] * p_{(h+k)%NB}[i] + cb[o]
    d = [[jnp.sum(cwt[k] * p_cols[j], axis=0, keepdims=True)               # (1, C)
          for j in range(NB)] for k in range(NH)]
    logits = [sum(d[k][(h + k) % NB] for k in range(NH)) + cb for h in range(NB)]

    # softmax over the NB window positions, times NB (as in the module).
    mx = logits[0]
    for h in range(1, NB):
        mx = jnp.maximum(mx, logits[h])
    exps = [jnp.exp(l - mx) for l in logits]
    den = exps[0]
    for e in exps[1:]:
        den = den + e
    rows = [(float(NB) * e) / den for e in exps]                           # (1, C)

    # Turn each (1, C) row into a (C, 1) column without jnp.transpose:
    #   col[c] = sum_l (c == l) * row[l]  (lane reduce of an iota mask).
    sub = jax.lax.broadcasted_iota(jnp.int32, (C, C), 0)
    lane = jax.lax.broadcasted_iota(jnp.int32, (C, C), 1)
    eye = (sub == lane).astype(jnp.float32)                                # (C, C)
    return [jnp.sum(eye * r, axis=1, keepdims=True) for r in rows]         # NB x (C, 1)


def _prep_params(params):
    f32 = jnp.float32
    w1t = jnp.transpose(params['att_w1'], (0, 2, 1)).astype(f32)           # (NB, C, NH)
    b1 = params['att_b1'].reshape(NB, 1, NH).astype(f32)
    w2 = params['att_w2'].astype(f32)                                      # (NB, C, NH)
    b2 = params['att_b2'].reshape(NB, C, 1).astype(f32)
    cwt = jnp.transpose(params['conv_w'][:, :, :, 0], (2, 1, 0)).astype(f32)  # (NH, C, C)
    cb = params['conv_b'].reshape(1, C).astype(f32)
    return w1t, b1, w2, b2, cwt, cb


def _param_specs():
    z3 = lambda *_: (0, 0, 0)
    z2 = lambda *_: (0, 0)
    return [
        pl.BlockSpec((NB, C, NH), z3),   # w1t
        pl.BlockSpec((NB, 1, NH), z3),   # b1
        pl.BlockSpec((NB, C, NH), z3),   # w2
        pl.BlockSpec((NB, C, 1), z3),    # b2
        pl.BlockSpec((NH, C, C), z3),    # cwt
        pl.BlockSpec((1, C), z2),        # cb
    ]


# ---------------------------------------------------------------------------
# FUSED path: one grid step per batch element, feature maps resident in VMEM.
# ---------------------------------------------------------------------------
def _make_fused_kernel(hw):
    inv_hw = 1.0 / float(hw)

    def kernel(w1t_ref, b1_ref, w2_ref, b2_ref, cwt_ref, cb_ref,
               x_ref, y_ref, z_ref, a_ref, o_ref):
        branches = (x_ref, y_ref, z_ref, a_ref)
        # per-branch per-channel means from the resident (C, HW) blocks
        m_cols = [jnp.sum(r[0].astype(jnp.float32), axis=-1, keepdims=True) * inv_hw
                  for r in branches]
        w_cols = _branch_weight_columns(
            m_cols,
            [w1t_ref[i] for i in range(NB)],
            [b1_ref[i] for i in range(NB)],
            [w2_ref[i] for i in range(NB)],
            [b2_ref[i] for i in range(NB)],
            [cwt_ref[k] for k in range(NH)],
            cb_ref[...])
        acc = branches[0][0].astype(jnp.float32) * w_cols[0]
        for i in range(1, NB):
            acc = acc + branches[i][0].astype(jnp.float32) * w_cols[i]
        o_ref[0] = acc.astype(o_ref.dtype)

    return kernel


def _feature_att4_fused(xf, yf, zf, af, prep, vmem_limit):
    B, _, HW = xf.shape
    fmap_spec = pl.BlockSpec((1, C, HW), lambda b: (b, 0, 0))
    return pl.pallas_call(
        _make_fused_kernel(HW),
        out_shape=jax.ShapeDtypeStruct((B, C, HW), xf.dtype),
        grid_spec=pltpu.PrefetchScalarGridSpec(
            num_scalar_prefetch=0,
            grid=(B,),
            in_specs=_param_specs() + [fmap_spec] * NB,
            out_specs=fmap_spec,
        ),
        compiler_params=pltpu.CompilerParams(
            dimension_semantics=("parallel",),
            vmem_limit_bytes=int(vmem_limit)),
    )(*prep, xf, yf, zf, af)


# ---------------------------------------------------------------------------
# TWO-PASS fallback (large HW): streaming tiles over the flattened spatial dim
# ---------------------------------------------------------------------------
def _pick_tile(hw, budget, itemsize, tile_target):
    # pass 2 moves 2*(NB inputs + 1 output) blocks plus ~2 f32 temps per step
    per_elem = C * (2 * (NB + 1) * itemsize + 2 * 4)
    cap = max(512, ((int(0.8 * budget) // per_elem) // 128) * 128)
    target = max(128, min((max(tile_target, 128) // 128) * 128, cap))
    if hw <= target:
        return hw                     # single full-width tile (always legal)
    lo = max(2048, target // 2)
    for t in range(target, lo - 1, -128):
        if hw % t == 0:
            return t                  # exact divisor near the target: no tail
    return target                     # cdiv grid + masked tail


def _make_sum_kernel(hw, tile, n_half, masked):
    def kernel(x_ref, y_ref, z_ref, a_ref, s_ref):
        t = pl.program_id(2)

        @pl.when(t == 0)
        def _init():
            s_ref[...] = jnp.zeros(s_ref.shape, s_ref.dtype)

        start = (pl.program_id(1) * n_half + t) * tile   # unclamped global start
        col = jax.lax.broadcasted_iota(jnp.int32, (1, NB), 1)
        if masked:
            lane = jax.lax.broadcasted_iota(jnp.int32, (C, tile), 1)
            valid = (start + lane) < hw
        acc = jnp.zeros((C, NB), jnp.float32)
        for j, r in enumerate((x_ref, y_ref, z_ref, a_ref)):
            v = r[0].astype(jnp.float32)
            if masked:
                v = jnp.where(valid, v, 0.0)
            acc = acc + jnp.sum(v, axis=-1, keepdims=True) * \
                (col == j).astype(jnp.float32)
        s_ref[0] += acc

    return kernel


def _wsum_kernel(w_ref, x_ref, y_ref, z_ref, a_ref, o_ref):
    w = w_ref[0]                                               # (C, NB) f32
    col = jax.lax.broadcasted_iota(jnp.int32, (1, NB), 1)
    acc = None
    for j, r in enumerate((x_ref, y_ref, z_ref, a_ref)):
        wj = jnp.sum(w * (col == j).astype(jnp.float32),
                     axis=-1, keepdims=True)                   # (C, 1)
        term = r[0].astype(jnp.float32) * wj
        acc = term if acc is None else acc + term
    o_ref[0] = acc.astype(o_ref.dtype)


def _feature_att4_two_pass(xf, yf, zf, af, prep, budget, tile_target):
    B, _, HW = xf.shape
    itemsize = jnp.dtype(xf.dtype).itemsize
    tile = _pick_tile(HW, budget, itemsize, tile_target)
    n_tiles = (HW + tile - 1) // tile
    n_half = (n_tiles + SPLIT - 1) // SPLIT
    masked = (SPLIT * n_half * tile != HW)

    # ---- pass 1: per-branch per-channel partial sums -----------------------
    def fmap_sum_map(b, p, t):
        # clamp so duplicated / overhanging tiles never DMA fully out of range
        return (b, 0, jnp.minimum(p * n_half + t, n_tiles - 1))

    fmap_sum_spec = pl.BlockSpec((1, C, tile), fmap_sum_map)
    sums_spec = pl.BlockSpec((1, C, NB), lambda b, p, t: (b * SPLIT + p, 0, 0))
    vmem1 = int(min(budget, max(16 * 1024 * 1024,
                                int(1.5 * (2 * NB * itemsize + 2 * 4) * C * tile))))
    partial = pl.pallas_call(
        _make_sum_kernel(HW, tile, n_half, masked),
        out_shape=jax.ShapeDtypeStruct((B * SPLIT, C, NB), jnp.float32),
        grid_spec=pltpu.PrefetchScalarGridSpec(
            num_scalar_prefetch=0,
            grid=(B, SPLIT, n_half),
            in_specs=[fmap_sum_spec] * NB,
            out_specs=sums_spec,
        ),
        compiler_params=pltpu.CompilerParams(
            dimension_semantics=("parallel", "parallel", "arbitrary"),
            vmem_limit_bytes=vmem1),
    )(xf, yf, zf, af)

    sums = jnp.sum(partial.reshape(B, SPLIT, C, NB), axis=1)    # (B, C, NB)

    # ---- tiny glue (B*4*C numbers) in plain JAX ----------------------------
    w1t, b1, w2, b2, cwt, cb = prep
    means = sums * (1.0 / float(HW))

    def one(mb):                                                # (C, NB) -> (C, NB)
        cols = _branch_weight_columns(
            [mb[:, j:j + 1] for j in range(NB)],
            [w1t[i] for i in range(NB)], [b1[i] for i in range(NB)],
            [w2[i] for i in range(NB)], [b2[i] for i in range(NB)],
            [cwt[k] for k in range(NH)], cb)
        return jnp.concatenate(cols, axis=-1)

    weights = jax.vmap(one)(means).astype(jnp.float32)          # (B, C, NB)

    # ---- pass 2 (hot path): out = sum_i w[:, i] * branch_i -----------------
    n_t2 = (HW + tile - 1) // tile
    fmap_spec = pl.BlockSpec((1, C, tile), lambda b, t: (b, 0, t))
    wcol_spec = pl.BlockSpec((1, C, NB), lambda b, t: (b, 0, 0))
    vmem2 = int(min(budget, max(16 * 1024 * 1024,
                                int(1.5 * (2 * (NB + 1) * itemsize + 2 * 4) * C * tile))))
    return pl.pallas_call(
        _wsum_kernel,
        out_shape=jax.ShapeDtypeStruct((B, C, HW), xf.dtype),
        grid_spec=pltpu.PrefetchScalarGridSpec(
            num_scalar_prefetch=0,
            grid=(B, n_t2),
            in_specs=[wcol_spec] + [fmap_spec] * NB,
            out_specs=fmap_spec,
        ),
        compiler_params=pltpu.CompilerParams(
            dimension_semantics=("parallel", "parallel"),
            vmem_limit_bytes=vmem2),
    )(weights, xf, yf, zf, af)


# ---------------------------------------------------------------------------
# Public entry point
# ---------------------------------------------------------------------------
def feature_att4(x, y, z, a, params, *, tile_target=8192, force_two_pass=False):
    B, c, H, W = x.shape
    assert c == C, f"FeatureAtt4 is defined for {C} channels, got {c}"
    HW = H * W
    itemsize = jnp.dtype(x.dtype).itemsize
    prep = _prep_params(params)

    # Contiguous (free) reshapes -- no stacked (B, 4, C, HW) copy is made.
    xf = x.reshape(B, C, HW)
    yf = y.reshape(B, C, HW)
    zf = z.reshape(B, C, HW)
    af = a.reshape(B, C, HW)

    budget = _vmem_budget()
    # fused residency: double-buffered in/out blocks + f32 temporaries + params
    fused_need = ((2 * NB + 2) * itemsize + 3 * 4) * C * HW + 2 * 1024 * 1024
    if (not force_two_pass) and fused_need <= budget:
        out = _feature_att4_fused(xf, yf, zf, af, prep, budget)
    else:
        out = _feature_att4_two_pass(xf, yf, zf, af, prep, budget, tile_target)
    return out.reshape(B, C, H, W)


# ---------------------------------------------------------------------------
# Parameters (PyTorch-equivalent) and a pure-JAX reference
# ---------------------------------------------------------------------------
def init_params(key):
    ks = jax.random.split(key, 6)
    # Full 3x3 conv weights (as in PyTorch); only the center tap contributes
    # because the ChannAtt conv input is 1x1 spatial with padding=1.
    att_w1_full = 0.1 * jax.random.normal(ks[0], (NB, NH, C, 3, 3), jnp.float32)
    att_b1 = 0.1 * jax.random.normal(ks[1], (NB, NH), jnp.float32)
    att_w2_full = 0.1 * jax.random.normal(ks[2], (NB, C, NH, 3, 3), jnp.float32)
    att_b2 = 0.1 * jax.random.normal(ks[3], (NB, C), jnp.float32)
    conv_w = 0.1 * jax.random.normal(ks[4], (C, C, 4, 1), jnp.float32)
    conv_b = 0.1 * jax.random.normal(ks[5], (C,), jnp.float32)
    return dict(
        att_w1=att_w1_full[..., 1, 1],   # (4, 4, 64) center taps
        att_b1=att_b1,
        att_w2=att_w2_full[..., 1, 1],   # (4, 64, 4) center taps
        att_b2=att_b2,
        conv_w=conv_w,
        conv_b=conv_b,
    )


def reference(x, y, z, a, P):
    """Pure-JAX reference of FeatureAtt4.forward (same math, no Pallas)."""
    inputs = [x, y, z, a]
    ps = []
    for i, inp in enumerate(inputs):
        m = jnp.mean(inp, axis=(2, 3))                                    # (B, C)
        h = jnp.maximum(
            jnp.einsum('bc,oc->bo', m, P['att_w1'][i]) + P['att_b1'][i], 0.0)
        cha = jax.nn.sigmoid(
            jnp.einsum('bo,co->bc', h, P['att_w2'][i]) + P['att_b2'][i])
        ps.append(m * cha)
    pf = jnp.stack(ps + ps[:3], axis=-1)                                  # (B, C, 7)
    cw = P['conv_w'][:, :, :, 0]                                          # (o, i, k)
    logits = jnp.stack(
        [jnp.einsum('oik,bik->bo', cw, pf[:, :, h:h + 4]) for h in range(4)],
        axis=-1) + P['conv_b'][None, :, None]                             # (B, C, 4)
    pw = 4.0 * jax.nn.softmax(logits, axis=-1)
    stacked = jnp.stack(inputs, axis=2)                                   # (B, C, 4, H, W)
    return jnp.sum(stacked * pw[:, :, :, None, None], axis=2)


if __name__ == "__main__":
    key = jax.random.PRNGKey(0)
    kp, kd = jax.random.split(key)
    params = init_params(kp)

    # (B, H, W, tile_target used for the forced two-pass run)
    configs = [
        (2, 16, 16, 8192),   # fused path + single-tile two-pass path
        (1, 12, 25, 128),    # fused path + multi-tile / masked-tail / split path
    ]
    for (B, H, W, tp_tile) in configs:
        kd, kx, ky, kz, ka = jax.random.split(kd, 5)
        x = jax.random.normal(kx, (B, C, H, W), jnp.float32)
        y = jax.random.normal(ky, (B, C, H, W), jnp.float32)
        z = jax.random.normal(kz, (B, C, H, W), jnp.float32)
        a = jax.random.normal(ka, (B, C, H, W), jnp.float32)

        with jax.default_matmul_precision('highest'):
            ref = reference(x, y, z, a, params)
            out_fused = feature_att4(x, y, z, a, params)
            out_2pass = feature_att4(x, y, z, a, params,
                                     force_two_pass=True, tile_target=tp_tile)
        jax.block_until_ready(out_fused)
        jax.block_until_ready(out_2pass)
        np.testing.assert_allclose(np.asarray(out_fused), np.asarray(ref),
                                   rtol=2e-3, atol=2e-3)
        np.testing.assert_allclose(np.asarray(out_2pass), np.asarray(ref),
                                   rtol=2e-3, atol=2e-3)

    print("KERNEL_OK")
</pallas_src>

<mosaic_0001>
module attributes {stable_mosaic.version = 11 : i64} {
  func.func @kernel(%arg0: i32, %arg1: memref<4x64x4xf32, #tpu.memory_space<vmem>>, %arg2: memref<4x1x4xf32, #tpu.memory_space<vmem>>, %arg3: memref<4x64x4xf32, #tpu.memory_space<vmem>>, %arg4: memref<4x64x1xf32, #tpu.memory_space<vmem>>, %arg5: memref<4x64x64xf32, #tpu.memory_space<vmem>>, %arg6: memref<1x64xf32, #tpu.memory_space<vmem>>, %arg7: memref<1x64x256xf32, #tpu.memory_space<vmem>>, %arg8: memref<1x64x256xf32, #tpu.memory_space<vmem>>, %arg9: memref<1x64x256xf32, #tpu.memory_space<vmem>>, %arg10: memref<1x64x256xf32, #tpu.memory_space<vmem>>, %arg11: memref<1x64x256xf32, #tpu.memory_space<vmem>>) attributes {dimension_semantics = [#tpu.dimension_semantics<parallel>], iteration_bounds = array<i64: 2>, scalar_prefetch = 0 : i64, scratch_operands = 0 : i64, tpu.core_type = #tpu.core_type<tc>, window_params = [{pipeline_mode = #tpu.pipeline_mode<synchronous>, transform_indices = @transform_0, window_bounds = array<i64: 4, 64, 4>}, {pipeline_mode = #tpu.pipeline_mode<synchronous>, transform_indices = @transform_1, window_bounds = array<i64: 4, 1, 4>}, {pipeline_mode = #tpu.pipeline_mode<synchronous>, transform_indices = @transform_2, window_bounds = array<i64: 4, 64, 4>}, {pipeline_mode = #tpu.pipeline_mode<synchronous>, transform_indices = @transform_3, window_bounds = array<i64: 4, 64, 1>}, {pipeline_mode = #tpu.pipeline_mode<synchronous>, transform_indices = @transform_4, window_bounds = array<i64: 4, 64, 64>}, {pipeline_mode = #tpu.pipeline_mode<synchronous>, transform_indices = @transform_5, window_bounds = array<i64: 1, 64>}, {transform_indices = @transform_6, window_bounds = array<i64: 1, 64, 256>}, {transform_indices = @transform_7, window_bounds = array<i64: 1, 64, 256>}, {transform_indices = @transform_8, window_bounds = array<i64: 1, 64, 256>}, {transform_indices = @transform_9, window_bounds = array<i64: 1, 64, 256>}, {transform_indices = @transform_10, window_bounds = array<i64: 1, 64, 256>}]} {
    %c0 = arith.constant 0 : index
    %c0_0 = arith.constant 0 : index
    %c0_1 = arith.constant 0 : index
    %0 = vector.load %arg7[%c0, %c0_0, %c0_1] : memref<1x64x256xf32, #tpu.memory_space<vmem>>, vector<1x64x256xf32>
    %1 = vector.shape_cast %0 : vector<1x64x256xf32> to vector<64x256xf32>
    %cst = arith.constant dense<0.000000e+00> : vector<64xf32>
    %2 = vector.multi_reduction <add>, %1, %cst [1] : vector<64x256xf32> to vector<64xf32>
    %3 = vector.shape_cast %2 : vector<64xf32> to vector<64x1xf32>
    %cst_2 = arith.constant 3.906250e-03 : f32
    %4 = vector.broadcast %cst_2 : f32 to vector<64x1xf32>
    %5 = arith.mulf %3, %4 : vector<64x1xf32>
    %c0_3 = arith.constant 0 : index
    %c0_4 = arith.constant 0 : index
    %c0_5 = arith.constant 0 : index
    %6 = vector.load %arg8[%c0_3, %c0_4, %c0_5] : memref<1x64x256xf32, #tpu.memory_space<vmem>>, vector<1x64x256xf32>
    %7 = vector.shape_cast %6 : vector<1x64x256xf32> to vector<64x256xf32>
    %cst_6 = arith.constant dense<0.000000e+00> : vector<64xf32>
    %8 = vector.multi_reduction <add>, %7, %cst_6 [1] : vector<64x256xf32> to vector<64xf32>
    %9 = vector.shape_cast %8 : vector<64xf32> to vector<64x1xf32>
    %cst_7 = arith.constant 3.906250e-03 : f32
    %10 = vector.broadcast %cst_7 : f32 to vector<64x1xf32>
    %11 = arith.mulf %9, %10 : vector<64x1xf32>
    %c0_8 = arith.constant 0 : index
    %c0_9 = arith.constant 0 : index
    %c0_10 = arith.constant 0 : index
    %12 = vector.load %arg9[%c0_8, %c0_9, %c0_10] : memref<1x64x256xf32, #tpu.memory_space<vmem>>, vector<1x64x256xf32>
    %13 = vector.shape_cast %12 : vector<1x64x256xf32> to vector<64x256xf32>
    %cst_11 = arith.constant dense<0.000000e+00> : vector<64xf32>
    %14 = vector.multi_reduction <add>, %13, %cst_11 [1] : vector<64x256xf32> to vector<64xf32>
    %15 = vector.shape_cast %14 : vector<64xf32> to vector<64x1xf32>
    %cst_12 = arith.constant 3.906250e-03 : f32
    %16 = vector.broadcast %cst_12 : f32 to vector<64x1xf32>
    %17 = arith.mulf %15, %16 : vector<64x1xf32>
    %c0_13 = arith.constant 0 : index
    %c0_14 = arith.constant 0 : index
    %c0_15 = arith.constant 0 : index
    %18 = vector.load %arg10[%c0_13, %c0_14, %c0_15] : memref<1x64x256xf32, #tpu.memory_space<vmem>>, vector<1x64x256xf32>
    %19 = vector.shape_cast %18 : vector<1x64x256xf32> to vector<64x256xf32>
    %cst_16 = arith.constant dense<0.000000e+00> : vector<64xf32>
    %20 = vector.multi_reduction <add>, %19, %cst_16 [1] : vector<64x256xf32> to vector<64xf32>
    %21 = vector.shape_cast %20 : vector<64xf32> to vector<64x1xf32>
    %cst_17 = arith.constant 3.906250e-03 : f32
    %22 = vector.broadcast %cst_17 : f32 to vector<64x1xf32>
    %23 = arith.mulf %21, %22 : vector<64x1xf32>
    %c0_18 = arith.constant 0 : index
    %c0_19 = arith.constant 0 : index
    %c0_20 = arith.constant 0 : index
    %24 = vector.load %arg1[%c0_18, %c0_19, %c0_20] : memref<4x64x4xf32, #tpu.memory_space<vmem>>, vector<1x64x4xf32>
    %25 = vector.shape_cast %24 : vector<1x64x4xf32> to vector<64x4xf32>
    %c1 = arith.constant 1 : index
    %c0_21 = arith.constant 0 : index
    %c0_22 = arith.constant 0 : index
    %26 = vector.load %arg1[%c1, %c0_21, %c0_22] : memref<4x64x4xf32, #tpu.memory_space<vmem>>, vector<1x64x4xf32>
    %27 = vector.shape_cast %26 : vector<1x64x4xf32> to vector<64x4xf32>
    %c2 = arith.constant 2 : index
    %c0_23 = arith.constant 0 : index
    %c0_24 = arith.constant 0 : index
    %28 = vector.load %arg1[%c2, %c0_23, %c0_24] : memref<4x64x4xf32, #tpu.memory_space<vmem>>, vector<1x64x4xf32>
    %29 = vector.shape_cast %28 : vector<1x64x4xf32> to vector<64x4xf32>
    %c3 = arith.constant 3 : index
    %c0_25 = arith.constant 0 : index
    %c0_26 = arith.constant 0 : index
    %30 = vector.load %arg1[%c3, %c0_25, %c0_26] : memref<4x64x4xf32, #tpu.memory_space<vmem>>, vector<1x64x4xf32>
    %31 = vector.shape_cast %30 : vector<1x64x4xf32> to vector<64x4xf32>
    %c0_27 = arith.constant 0 : index
    %c0_28 = arith.constant 0 : index
    %c0_29 = arith.constant 0 : index
    %32 = vector.load %arg2[%c0_27, %c0_28, %c0_29] : memref<4x1x4xf32, #tpu.memory_space<vmem>>, vector<1x1x4xf32>
    %33 = vector.shape_cast %32 : vector<1x1x4xf32> to vector<1x4xf32>
    %c1_30 = arith.constant 1 : index
    %c0_31 = arith.constant 0 : index
    %c0_32 = arith.constant 0 : index
    %34 = vector.load %arg2[%c1_30, %c0_31, %c0_32] : memref<4x1x4xf32, #tpu.memory_space<vmem>>, vector<1x1x4xf32>
    %35 = vector.shape_cast %34 : vector<1x1x4xf32> to vector<1x4xf32>
    %c2_33 = arith.constant 2 : index
    %c0_34 = arith.constant 0 : index
    %c0_35 = arith.constant 0 : index
    %36 = vector.load %arg2[%c2_33, %c0_34, %c0_35] : memref<4x1x4xf32, #tpu.memory_space<vmem>>, vector<1x1x4xf32>
    %37 = vector.shape_cast %36 : vector<1x1x4xf32> to vector<1x4xf32>
    %c3_36 = arith.constant 3 : index
    %c0_37 = arith.constant 0 : index
    %c0_38 = arith.constant 0 : index
    %38 = vector.load %arg2[%c3_36, %c0_37, %c0_38] : memref<4x1x4xf32, #tpu.memory_space<vmem>>, vector<1x1x4xf32>
    %39 = vector.shape_cast %38 : vector<1x1x4xf32> to vector<1x4xf32>
    %c0_39 = arith.constant 0 : index
    %c0_40 = arith.constant 0 : index
    %c0_41 = arith.constant 0 : index
    %40 = vector.load %arg3[%c0_39, %c0_40, %c0_41] : memref<4x64x4xf32, #tpu.memory_space<vmem>>, vector<1x64x4xf32>
    %41 = vector.shape_cast %40 : vector<1x64x4xf32> to vector<64x4xf32>
    %c1_42 = arith.constant 1 : index
    %c0_43 = arith.constant 0 : index
    %c0_44 = arith.constant 0 : index
    %42 = vector.load %arg3[%c1_42, %c0_43, %c0_44] : memref<4x64x4xf32, #tpu.memory_space<vmem>>, vector<1x64x4xf32>
    %43 = vector.shape_cast %42 : vector<1x64x4xf32> to vector<64x4xf32>
    %c2_45 = arith.constant 2 : index
    %c0_46 = arith.constant 0 : index
    %c0_47 = arith.constant 0 : index
    %44 = vector.load %arg3[%c2_45, %c0_46, %c0_47] : memref<4x64x4xf32, #tpu.memory_space<vmem>>, vector<1x64x4xf32>
    %45 = vector.shape_cast %44 : vector<1x64x4xf32> to vector<64x4xf32>
    %c3_48 = arith.constant 3 : index
    %c0_49 = arith.constant 0 : index
    %c0_50 = arith.constant 0 : index
    %46 = vector.load %arg3[%c3_48, %c0_49, %c0_50] : memref<4x64x4xf32, #tpu.memory_space<vmem>>, vector<1x64x4xf32>
    %47 = vector.shape_cast %46 : vector<1x64x4xf32> to vector<64x4xf32>
    %c0_51 = arith.constant 0 : index
    %c0_52 = arith.constant 0 : index
    %c0_53 = arith.constant 0 : index
    %48 = vector.load %arg4[%c0_51, %c0_52, %c0_53] : memref<4x64x1xf32, #tpu.memory_space<vmem>>, vector<1x64x1xf32>
    %49 = vector.shape_cast %48 : vector<1x64x1xf32> to vector<64x1xf32>
    %c1_54 = arith.constant 1 : index
    %c0_55 = arith.constant 0 : index
    %c0_56 = arith.constant 0 : index
    %50 = vector.load %arg4[%c1_54, %c0_55, %c0_56] : memref<4x64x1xf32, #tpu.memory_space<vmem>>, vector<1x64x1xf32>
    %51 = vector.shape_cast %50 : vector<1x64x1xf32> to vector<64x1xf32>
    %c2_57 = arith.constant 2 : index
    %c0_58 = arith.constant 0 : index
    %c0_59 = arith.constant 0 : index
    %52 = vector.load %arg4[%c2_57, %c0_58, %c0_59] : memref<4x64x1xf32, #tpu.memory_space<vmem>>, vector<1x64x1xf32>
    %53 = vector.shape_cast %52 : vector<1x64x1xf32> to vector<64x1xf32>
    %c3_60 = arith.constant 3 : index
    %c0_61 = arith.constant 0 : index
    %c0_62 = arith.constant 0 : index
    %54 = vector.load %arg4[%c3_60, %c0_61, %c0_62] : memref<4x64x1xf32, #tpu.memory_space<vmem>>, vector<1x64x1xf32>
    %55 = vector.shape_cast %54 : vector<1x64x1xf32> to vector<64x1xf32>
    %c0_63 = arith.constant 0 : index
    %c0_64 = arith.constant 0 : index
    %c0_65 = arith.constant 0 : index
    %56 = vector.load %arg5[%c0_63, %c0_64, %c0_65] : memref<4x64x64xf32, #tpu.memory_space<vmem>>, vector<1x64x64xf32>
    %57 = vector.shape_cast %56 : vector<1x64x64xf32> to vector<64x64xf32>
    %c1_66 = arith.constant 1 : index
    %c0_67 = arith.constant 0 : index
    %c0_68 = arith.constant 0 : index
    %58 = vector.load %arg5[%c1_66, %c0_67, %c0_68] : memref<4x64x64xf32, #tpu.memory_space<vmem>>, vector<1x64x64xf32>
    %59 = vector.shape_cast %58 : vector<1x64x64xf32> to vector<64x64xf32>
    %c2_69 = arith.constant 2 : index
    %c0_70 = arith.constant 0 : index
    %c0_71 = arith.constant 0 : index
    %60 = vector.load %arg5[%c2_69, %c0_70, %c0_71] : memref<4x64x64xf32, #tpu.memory_space<vmem>>, vector<1x64x64xf32>
    %61 = vector.shape_cast %60 : vector<1x64x64xf32> to vector<64x64xf32>
    %c3_72 = arith.constant 3 : index
    %c0_73 = arith.constant 0 : index
    %c0_74 = arith.constant 0 : index
    %62 = vector.load %arg5[%c3_72, %c0_73, %c0_74] : memref<4x64x64xf32, #tpu.memory_space<vmem>>, vector<1x64x64xf32>
    %63 = vector.shape_cast %62 : vector<1x64x64xf32> to vector<64x64xf32>
    %c0_75 = arith.constant 0 : index
    %c0_76 = arith.constant 0 : index
    %64 = vector.load %arg6[%c0_75, %c0_76] : memref<1x64xf32, #tpu.memory_space<vmem>>, vector<1x64xf32>
    %65 = vector.broadcast %5 : vector<64x1xf32> to vector<64x4xf32>
    %66 = arith.mulf %25, %65 : vector<64x4xf32>
    %cst_77 = arith.constant dense<0.000000e+00> : vector<4xf32>
    %67 = vector.multi_reduction <add>, %66, %cst_77 [0] : vector<64x4xf32> to vector<4xf32>
    %68 = vector.shape_cast %67 : vector<4xf32> to vector<1x4xf32>
    %69 = arith.addf %68, %33 : vector<1x4xf32>
    %cst_78 = arith.constant 0.000000e+00 : f32
    %70 = vector.broadcast %cst_78 : f32 to vector<1x4xf32>
    %71 = arith.maximumf %69, %70 : vector<1x4xf32>
    %72 = vector.broadcast %71 : vector<1x4xf32> to vector<64x4xf32>
    %73 = arith.mulf %41, %72 : vector<64x4xf32>
    %cst_79 = arith.constant dense<0.000000e+00> : vector<64xf32>
    %74 = vector.multi_reduction <add>, %73, %cst_79 [1] : vector<64x4xf32> to vector<64xf32>
    %75 = vector.shape_cast %74 : vector<64xf32> to vector<64x1xf32>
    %76 = arith.addf %75, %49 : vector<64x1xf32>
    %cst_80 = arith.constant 0.000000e+00 : f32
    %77 = vector.broadcast %cst_80 : f32 to vector<64x1xf32>
    %78 = arith.subf %77, %76 : vector<64x1xf32>
    %79 = math.exp %78 : vector<64x1xf32>
    %cst_81 = arith.constant 1.000000e+00 : f32
    %80 = vector.broadcast %cst_81 : f32 to vector<64x1xf32>
    %81 = arith.addf %80, %79 : vector<64x1xf32>
    %cst_82 = arith.constant 1.000000e+00 : f32
    %82 = vector.broadcast %cst_82 : f32 to vector<64x1xf32>
    %83 = arith.divf %82, %81 : vector<64x1xf32>
    %84 = arith.mulf %5, %83 : vector<64x1xf32>
    %85 = vector.broadcast %11 : vector<64x1xf32> to vector<64x4xf32>
    %86 = arith.mulf %27, %85 : vector<64x4xf32>
    %cst_83 = arith.constant dense<0.000000e+00> : vector<4xf32>
    %87 = vector.multi_reduction <add>, %86, %cst_83 [0] : vector<64x4xf32> to vector<4xf32>
    %88 = vector.shape_cast %87 : vector<4xf32> to vector<1x4xf32>
    %89 = arith.addf %88, %35 : vector<1x4xf32>
    %cst_84 = arith.constant 0.000000e+00 : f32
    %90 = vector.broadcast %cst_84 : f32 to vector<1x4xf32>
    %91 = arith.maximumf %89, %90 : vector<1x4xf32>
    %92 = vector.broadcast %91 : vector<1x4xf32> to vector<64x4xf32>
    %93 = arith.mulf %43, %92 : vector<64x4xf32>
    %cst_85 = arith.constant dense<0.000000e+00> : vector<64xf32>
    %94 = vector.multi_reduction <add>, %93, %cst_85 [1] : vector<64x4xf32> to vector<64xf32>
    %95 = vector.shape_cast %94 : vector<64xf32> to vector<64x1xf32>
    %96 = arith.addf %95, %51 : vector<64x1xf32>
    %cst_86 = arith.constant 0.000000e+00 : f32
    %97 = vector.broadcast %cst_86 : f32 to vector<64x1xf32>
    %98 = arith.subf %97, %96 : vector<64x1xf32>
    %99 = math.exp %98 : vector<64x1xf32>
    %cst_87 = arith.constant 1.000000e+00 : f32
    %100 = vector.broadcast %cst_87 : f32 to vector<64x1xf32>
    %101 = arith.addf %100, %99 : vector<64x1xf32>
    %cst_88 = arith.constant 1.000000e+00 : f32
    %102 = vector.broadcast %cst_88 : f32 to vector<64x1xf32>
    %103 = arith.divf %102, %101 : vector<64x1xf32>
    %104 = arith.mulf %11, %103 : vector<64x1xf32>
    %105 = vector.broadcast %17 : vector<64x1xf32> to vector<64x4xf32>
    %106 = arith.mulf %29, %105 : vector<64x4xf32>
    %cst_89 = arith.constant dense<0.000000e+00> : vector<4xf32>
    %107 = vector.multi_reduction <add>, %106, %cst_89 [0] : vector<64x4xf32> to vector<4xf32>
    %108 = vector.shape_cast %107 : vector<4xf32> to vector<1x4xf32>
    %109 = arith.addf %108, %37 : vector<1x4xf32>
    %cst_90 = arith.constant 0.000000e+00 : f32
    %110 = vector.broadcast %cst_90 : f32 to vector<1x4xf32>
    %111 = arith.maximumf %109, %110 : vector<1x4xf32>
    %112 = vector.broadcast %111 : vector<1x4xf32> to vector<64x4xf32>
    %113 = arith.mulf %45, %112 : vector<64x4xf32>
    %cst_91 = arith.constant dense<0.000000e+00> : vector<64xf32>
    %114 = vector.multi_reduction <add>, %113, %cst_91 [1] : vector<64x4xf32> to vector<64xf32>
    %115 = vector.shape_cast %114 : vector<64xf32> to vector<64x1xf32>
    %116 = arith.addf %115, %53 : vector<64x1xf32>
    %cst_92 = arith.constant 0.000000e+00 : f32
    %117 = vector.broadcast %cst_92 : f32 to vector<64x1xf32>
    %118 = arith.subf %117, %116 : vector<64x1xf32>
    %119 = math.exp %118 : vector<64x1xf32>
    %cst_93 = arith.constant 1.000000e+00 : f32
    %120 = vector.broadcast %cst_93 : f32 to vector<64x1xf32>
    %121 = arith.addf %120, %119 : vector<64x1xf32>
    %cst_94 = arith.constant 1.000000e+00 : f32
    %122 = vector.broadcast %cst_94 : f32 to vector<64x1xf32>
    %123 = arith.divf %122, %121 : vector<64x1xf32>
    %124 = arith.mulf %17, %123 : vector<64x1xf32>
    %125 = vector.broadcast %23 : vector<64x1xf32> to vector<64x4xf32>
    %126 = arith.mulf %31, %125 : vector<64x4xf32>
    %cst_95 = arith.constant dense<0.000000e+00> : vector<4xf32>
    %127 = vector.multi_reduction <add>, %126, %cst_95 [0] : vector<64x4xf32> to vector<4xf32>
    %128 = vector.shape_cast %127 : vector<4xf32> to vector<1x4xf32>
    %129 = arith.addf %128, %39 : vector<1x4xf32>
    %cst_96 = arith.constant 0.000000e+00 : f32
    %130 = vector.broadcast %cst_96 : f32 to vector<1x4xf32>
    %131 = arith.maximumf %129, %130 : vector<1x4xf32>
    %132 = vector.broadcast %131 : vector<1x4xf32> to vector<64x4xf32>
    %133 = arith.mulf %47, %132 : vector<64x4xf32>
    %cst_97 = arith.constant dense<0.000000e+00> : vector<64xf32>
    %134 = vector.multi_reduction <add>, %133, %cst_97 [1] : vector<64x4xf32> to vector<64xf32>
    %135 = vector.shape_cast %134 : vector<64xf32> to vector<64x1xf32>
    %136 = arith.addf %135, %55 : vector<64x1xf32>
    %cst_98 = arith.constant 0.000000e+00 : f32
    %137 = vector.broadcast %cst_98 : f32 to vector<64x1xf32>
    %138 = arith.subf %137, %136 : vector<64x1xf32>
    %139 = math.exp %138 : vector<64x1xf32>
    %cst_99 = arith.constant 1.000000e+00 : f32
    %140 = vector.broadcast %cst_99 : f32 to vector<64x1xf32>
    %141 = arith.addf %140, %139 : vector<64x1xf32>
    %cst_100 = arith.constant 1.000000e+00 : f32
    %142 = vector.broadcast %cst_100 : f32 to vector<64x1xf32>
    %143 = arith.divf %142, %141 : vector<64x1xf32>
    %144 = arith.mulf %23, %143 : vector<64x1xf32>
    %145 = vector.broadcast %84 : vector<64x1xf32> to vector<64x64xf32>
    %146 = arith.mulf %57, %145 : vector<64x64xf32>
    %cst_101 = arith.constant dense<0.000000e+00> : vector<64xf32>
    %147 = vector.multi_reduction <add>, %146, %cst_101 [0] : vector<64x64xf32> to vector<64xf32>
    %148 = vector.shape_cast %147 : vector<64xf32> to vector<1x64xf32>
    %149 = vector.broadcast %104 : vector<64x1xf32> to vector<64x64xf32>
    %150 = arith.mulf %57, %149 : vector<64x64xf32>
    %cst_102 = arith.constant dense<0.000000e+00> : vector<64xf32>
    %151 = vector.multi_reduction <add>, %150, %cst_102 [0] : vector<64x64xf32> to vector<64xf32>
    %152 = vector.shape_cast %151 : vector<64xf32> to vector<1x64xf32>
    %153 = vector.broadcast %124 : vector<64x1xf32> to vector<64x64xf32>
    %154 = arith.mulf %57, %153 : vector<64x64xf32>
    %cst_103 = arith.constant dense<0.000000e+00> : vector<64xf32>
    %155 = vector.multi_reduction <add>, %154, %cst_103 [0] : vector<64x64xf32> to vector<64xf32>
    %156 = vector.shape_cast %155 : vector<64xf32> to vector<1x64xf32>
    %157 = vector.broadcast %144 : vector<64x1xf32> to vector<64x64xf32>
    %158 = arith.mulf %57, %157 : vector<64x64xf32>
    %cst_104 = arith.constant dense<0.000000e+00> : vector<64xf32>
    %159 = vector.multi_reduction <add>, %158, %cst_104 [0] : vector<64x64xf32> to vector<64xf32>
    %160 = vector.shape_cast %159 : vector<64xf32> to vector<1x64xf32>
    %161 = vector.broadcast %84 : vector<64x1xf32> to vector<64x64xf32>
    %162 = arith.mulf %59, %161 : vector<64x64xf32>
    %cst_105 = arith.constant dense<0.000000e+00> : vector<64xf32>
    %163 = vector.multi_reduction <add>, %162, %cst_105 [0] : vector<64x64xf32> to vector<64xf32>
    %164 = vector.shape_cast %163 : vector<64xf32> to vector<1x64xf32>
    %165 = vector.broadcast %104 : vector<64x1xf32> to vector<64x64xf32>
    %166 = arith.mulf %59, %165 : vector<64x64xf32>
    %cst_106 = arith.constant dense<0.000000e+00> : vector<64xf32>
    %167 = vector.multi_reduction <add>, %166, %cst_106 [0] : vector<64x64xf32> to vector<64xf32>
    %168 = vector.shape_cast %167 : vector<64xf32> to vector<1x64xf32>
    %169 = vector.broadcast %124 : vector<64x1xf32> to vector<64x64xf32>
    %170 = arith.mulf %59, %169 : vector<64x64xf32>
    %cst_107 = arith.constant dense<0.000000e+00> : vector<64xf32>
    %171 = vector.multi_reduction <add>, %170, %cst_107 [0] : vector<64x64xf32> to vector<64xf32>
    %172 = vector.shape_cast %171 : vector<64xf32> to vector<1x64xf32>
    %173 = vector.broadcast %144 : vector<64x1xf32> to vector<64x64xf32>
    %174 = arith.mulf %59, %173 : vector<64x64xf32>
    %cst_108 = arith.constant dense<0.000000e+00> : vector<64xf32>
    %175 = vector.multi_reduction <add>, %174, %cst_108 [0] : vector<64x64xf32> to vector<64xf32>
    %176 = vector.shape_cast %175 : vector<64xf32> to vector<1x64xf32>
    %177 = vector.broadcast %84 : vector<64x1xf32> to vector<64x64xf32>
    %178 = arith.mulf %61, %177 : vector<64x64xf32>
    %cst_109 = arith.constant dense<0.000000e+00> : vector<64xf32>
    %179 = vector.multi_reduction <add>, %178, %cst_109 [0] : vector<64x64xf32> to vector<64xf32>
    %180 = vector.shape_cast %179 : vector<64xf32> to vector<1x64xf32>
    %181 = vector.broadcast %104 : vector<64x1xf32> to vector<64x64xf32>
    %182 = arith.mulf %61, %181 : vector<64x64xf32>
    %cst_110 = arith.constant dense<0.000000e+00> : vector<64xf32>
    %183 = vector.multi_reduction <add>, %182, %cst_110 [0] : vector<64x64xf32> to vector<64xf32>
    %184 = vector.shape_cast %183 : vector<64xf32> to vector<1x64xf32>
    %185 = vector.broadcast %124 : vector<64x1xf32> to vector<64x64xf32>
    %186 = arith.mulf %61, %185 : vector<64x64xf32>
    %cst_111 = arith.constant dense<0.000000e+00> : vector<64xf32>
    %187 = vector.multi_reduction <add>, %186, %cst_111 [0] : vector<64x64xf32> to vector<64xf32>
    %188 = vector.shape_cast %187 : vector<64xf32> to vector<1x64xf32>
    %189 = vector.broadcast %144 : vector<64x1xf32> to vector<64x64xf32>
    %190 = arith.mulf %61, %189 : vector<64x64xf32>
    %cst_112 = arith.constant dense<0.000000e+00> : vector<64xf32>
    %191 = vector.multi_reduction <add>, %190, %cst_112 [0] : vector<64x64xf32> to vector<64xf32>
    %192 = vector.shape_cast %191 : vector<64xf32> to vector<1x64xf32>
    %193 = vector.broadcast %84 : vector<64x1xf32> to vector<64x64xf32>
    %194 = arith.mulf %63, %193 : vector<64x64xf32>
    %cst_113 = arith.constant dense<0.000000e+00> : vector<64xf32>
    %195 = vector.multi_reduction <add>, %194, %cst_113 [0] : vector<64x64xf32> to vector<64xf32>
    %196 = vector.shape_cast %195 : vector<64xf32> to vector<1x64xf32>
    %197 = vector.broadcast %104 : vector<64x1xf32> to vector<64x64xf32>
    %198 = arith.mulf %63, %197 : vector<64x64xf32>
    %cst_114 = arith.constant dense<0.000000e+00> : vector<64xf32>
    %199 = vector.multi_reduction <add>, %198, %cst_114 [0] : vector<64x64xf32> to vector<64xf32>
    %200 = vector.shape_cast %199 : vector<64xf32> to vector<1x64xf32>
    %201 = vector.broadcast %124 : vector<64x1xf32> to vector<64x64xf32>
    %202 = arith.mulf %63, %201 : vector<64x64xf32>
    %cst_115 = arith.constant dense<0.000000e+00> : vector<64xf32>
    %203 = vector.multi_reduction <add>, %202, %cst_115 [0] : vector<64x64xf32> to vector<64xf32>
    %204 = vector.shape_cast %203 : vector<64xf32> to vector<1x64xf32>
    %205 = vector.broadcast %144 : vector<64x1xf32> to vector<64x64xf32>
    %206 = arith.mulf %63, %205 : vector<64x64xf32>
    %cst_116 = arith.constant dense<0.000000e+00> : vector<64xf32>
    %207 = vector.multi_reduction <add>, %206, %cst_116 [0] : vector<64x64xf32> to vector<64xf32>
    %208 = vector.shape_cast %207 : vector<64xf32> to vector<1x64xf32>
    %cst_117 = arith.constant 0.000000e+00 : f32
    %209 = vector.broadcast %cst_117 : f32 to vector<1x64xf32>
    %210 = arith.addf %209, %148 : vector<1x64xf32>
    %211 = arith.addf %210, %168 : vector<1x64xf32>
    %212 = arith.addf %211, %188 : vector<1x64xf32>
    %213 = arith.addf %212, %208 : vector<1x64xf32>
    %214 = arith.addf %213, %64 : vector<1x64xf32>
    %cst_118 = arith.constant 0.000000e+00 : f32
    %215 = vector.broadcast %cst_118 : f32 to vector<1x64xf32>
    %216 = arith.addf %215, %152 : vector<1x64xf32>
    %217 = arith.addf %216, %172 : vector<1x64xf32>
    %218 = arith.addf %217, %192 : vector<1x64xf32>
    %219 = arith.addf %218, %196 : vector<1x64xf32>
    %220 = arith.addf %219, %64 : vector<1x64xf32>
    %cst_119 = arith.constant 0.000000e+00 : f32
    %221 = vector.broadcast %cst_119 : f32 to vector<1x64xf32>
    %222 = arith.addf %221, %156 : vector<1x64xf32>
    %223 = arith.addf %222, %176 : vector<1x64xf32>
    %224 = arith.addf %223, %180 : vector<1x64xf32>
    %225 = arith.addf %224, %200 : vector<1x64xf32>
    %226 = arith.addf %225, %64 : vector<1x64xf32>
    %cst_120 = arith.constant 0.000000e+00 : f32
    %227 = vector.broadcast %cst_120 : f32 to vector<1x64xf32>
    %228 = arith.addf %227, %160 : vector<1x64xf32>
    %229 = arith.addf %228, %164 : vector<1x64xf32>
    %230 = arith.addf %229, %184 : vector<1x64xf32>
    %231 = arith.addf %230, %204 : vector<1x64xf32>
    %232 = arith.addf %231, %64 : vector<1x64xf32>
    %233 = arith.maximumf %214, %220 : vector<1x64xf32>
    %234 = arith.maximumf %233, %226 : vector<1x64xf32>
    %235 = arith.maximumf %234, %232 : vector<1x64xf32>
    %236 = arith.subf %214, %235 : vector<1x64xf32>
    %237 = math.exp %236 : vector<1x64xf32>
    %238 = arith.subf %220, %235 : vector<1x64xf32>
    %239 = math.exp %238 : vector<1x64xf32>
    %240 = arith.subf %226, %235 : vector<1x64xf32>
    %241 = math.exp %240 : vector<1x64xf32>
    %242 = arith.subf %232, %235 : vector<1x64xf32>
    %243 = math.exp %242 : vector<1x64xf32>
    %244 = arith.addf %237, %239 : vector<1x64xf32>
    %245 = arith.addf %244, %241 : vector<1x64xf32>
    %246 = arith.addf %245, %243 : vector<1x64xf32>
    %cst_121 = arith.constant 4.000000e+00 : f32
    %247 = vector.broadcast %cst_121 : f32 to vector<1x64xf32>
    %248 = arith.mulf %247, %237 : vector<1x64xf32>
    %249 = arith.divf %248, %246 : vector<1x64xf32>
    %cst_122 = arith.constant 4.000000e+00 : f32
    %250 = vector.broadcast %cst_122 : f32 to vector<1x64xf32>
    %251 = arith.mulf %250, %239 : vector<1x64xf32>
    %252 = arith.divf %251, %246 : vector<1x64xf32>
    %cst_123 = arith.constant 4.000000e+00 : f32
    %253 = vector.broadcast %cst_123 : f32 to vector<1x64xf32>
    %254 = arith.mulf %253, %241 : vector<1x64xf32>
    %255 = arith.divf %254, %246 : vector<1x64xf32>
    %cst_124 = arith.constant 4.000000e+00 : f32
    %256 = vector.broadcast %cst_124 : f32 to vector<1x64xf32>
    %257 = arith.mulf %256, %243 : vector<1x64xf32>
    %258 = arith.divf %257, %246 : vector<1x64xf32>
    %259 = tpu.iota {dimensions = array<i32: 0>} : vector<64x64xi32>
    %260 = tpu.iota {dimensions = array<i32: 1>} : vector<64x64xi32>
    %261 = arith.cmpi eq, %259, %260 : vector<64x64xi32>
    %262 = arith.extui %261 : vector<64x64xi1> to vector<64x64xi32>
    %263 = arith.sitofp %262 : vector<64x64xi32> to vector<64x64xf32>
    %264 = vector.broadcast %249 : vector<1x64xf32> to vector<64x64xf32>
    %265 = arith.mulf %263, %264 : vector<64x64xf32>
    %cst_125 = arith.constant dense<0.000000e+00> : vector<64xf32>
    %266 = vector.multi_reduction <add>, %265, %cst_125 [1] : vector<64x64xf32> to vector<64xf32>
    %267 = vector.shape_cast %266 : vector<64xf32> to vector<64x1xf32>
    %268 = vector.broadcast %252 : vector<1x64xf32> to vector<64x64xf32>
    %269 = arith.mulf %263, %268 : vector<64x64xf32>
    %cst_126 = arith.constant dense<0.000000e+00> : vector<64xf32>
    %270 = vector.multi_reduction <add>, %269, %cst_126 [1] : vector<64x64xf32> to vector<64xf32>
    %271 = vector.shape_cast %270 : vector<64xf32> to vector<64x1xf32>
    %272 = vector.broadcast %255 : vector<1x64xf32> to vector<64x64xf32>
    %273 = arith.mulf %263, %272 : vector<64x64xf32>
    %cst_127 = arith.constant dense<0.000000e+00> : vector<64xf32>
    %274 = vector.multi_reduction <add>, %273, %cst_127 [1] : vector<64x64xf32> to vector<64xf32>
    %275 = vector.shape_cast %274 : vector<64xf32> to vector<64x1xf32>
    %276 = vector.broadcast %258 : vector<1x64xf32> to vector<64x64xf32>
    %277 = arith.mulf %263, %276 : vector<64x64xf32>
    %cst_128 = arith.constant dense<0.000000e+00> : vector<64xf32>
    %278 = vector.multi_reduction <add>, %277, %cst_128 [1] : vector<64x64xf32> to vector<64xf32>
    %279 = vector.shape_cast %278 : vector<64xf32> to vector<64x1xf32>
    %c0_129 = arith.constant 0 : index
    %c0_130 = arith.constant 0 : index
    %c0_131 = arith.constant 0 : index
    %280 = vector.load %arg7[%c0_129, %c0_130, %c0_131] : memref<1x64x256xf32, #tpu.memory_space<vmem>>, vector<1x64x256xf32>
    %281 = vector.shape_cast %280 : vector<1x64x256xf32> to vector<64x256xf32>
    %282 = vector.broadcast %267 : vector<64x1xf32> to vector<64x256xf32>
    %283 = arith.mulf %281, %282 : vector<64x256xf32>
    %c0_132 = arith.constant 0 : index
    %c0_133 = arith.constant 0 : index
    %c0_134 = arith.constant 0 : index
    %284 = vector.load %arg8[%c0_132, %c0_133, %c0_134] : memref<1x64x256xf32, #tpu.memory_space<vmem>>, vector<1x64x256xf32>
    %285 = vector.shape_cast %284 : vector<1x64x256xf32> to vector<64x256xf32>
    %286 = vector.broadcast %271 : vector<64x1xf32> to vector<64x256xf32>
    %287 = arith.mulf %285, %286 : vector<64x256xf32>
    %288 = arith.addf %283, %287 : vector<64x256xf32>
    %c0_135 = arith.constant 0 : index
    %c0_136 = arith.constant 0 : index
    %c0_137 = arith.constant 0 : index
    %289 = vector.load %arg9[%c0_135, %c0_136, %c0_137] : memref<1x64x256xf32, #tpu.memory_space<vmem>>, vector<1x64x256xf32>
    %290 = vector.shape_cast %289 : vector<1x64x256xf32> to vector<64x256xf32>
    %291 = vector.broadcast %275 : vector<64x1xf32> to vector<64x256xf32>
    %292 = arith.mulf %290, %291 : vector<64x256xf32>
    %293 = arith.addf %288, %292 : vector<64x256xf32>
    %c0_138 = arith.constant 0 : index
    %c0_139 = arith.constant 0 : index
    %c0_140 = arith.constant 0 : index
    %294 = vector.load %arg10[%c0_138, %c0_139, %c0_140] : memref<1x64x256xf32, #tpu.memory_space<vmem>>, vector<1x64x256xf32>
    %295 = vector.shape_cast %294 : vector<1x64x256xf32> to vector<64x256xf32>
    %296 = vector.broadcast %279 : vector<64x1xf32> to vector<64x256xf32>
    %297 = arith.mulf %295, %296 : vector<64x256xf32>
    %298 = arith.addf %293, %297 : vector<64x256xf32>
    %c0_141 = arith.constant 0 : index
    %c0_142 = arith.constant 0 : index
    %c0_143 = arith.constant 0 : index
    %299 = vector.load %arg11[%c0_141, %c0_142, %c0_143] : memref<1x64x256xf32, #tpu.memory_space<vmem>>, vector<1x64x256xf32>
    %300 = vector.shape_cast %299 : vector<1x64x256xf32> to vector<64x256xf32>
    %301 = vector.shape_cast %298 : vector<64x256xf32> to vector<1x64x256xf32>
    tpu.vector_store %arg11[%c0_141, %c0_142, %c0_143], %301 {strides = array<i32>} : memref<1x64x256xf32, #tpu.memory_space<vmem>>, vector<1x64x256xf32>,
    return
  }
  func.func @transform_0(%arg0: i32) -> (i32, i32, i32) {
    %c0_i32 = arith.constant 0 : i32
    %c0_i32_0 = arith.constant 0 : i32
    %c0_i32_1 = arith.constant 0 : i32
    %c0_i32_2 = arith.constant 0 : i32
    return %c0_i32, %c0_i32_0, %c0_i32_1 : i32, i32, i32
  }
  func.func @transform_1(%arg0: i32) -> (i32, i32, i32) {
    %c0_i32 = arith.constant 0 : i32
    %c0_i32_0 = arith.constant 0 : i32
    %c0_i32_1 = arith.constant 0 : i32
    %c0_i32_2 = arith.constant 0 : i32
    return %c0_i32, %c0_i32_0, %c0_i32_1 : i32, i32, i32
  }
  func.func @transform_2(%arg0: i32) -> (i32, i32, i32) {
    %c0_i32 = arith.constant 0 : i32
    %c0_i32_0 = arith.constant 0 : i32
    %c0_i32_1 = arith.constant 0 : i32
    %c0_i32_2 = arith.constant 0 : i32
    return %c0_i32, %c0_i32_0, %c0_i32_1 : i32, i32, i32
  }
  func.func @transform_3(%arg0: i32) -> (i32, i32, i32) {
    %c0_i32 = arith.constant 0 : i32
    %c0_i32_0 = arith.constant 0 : i32
    %c0_i32_1 = arith.constant 0 : i32
    %c0_i32_2 = arith.constant 0 : i32
    return %c0_i32, %c0_i32_0, %c0_i32_1 : i32, i32, i32
  }
  func.func @transform_4(%arg0: i32) -> (i32, i32, i32) {
    %c0_i32 = arith.constant 0 : i32
    %c0_i32_0 = arith.constant 0 : i32
    %c0_i32_1 = arith.constant 0 : i32
    %c0_i32_2 = arith.constant 0 : i32
    return %c0_i32, %c0_i32_0, %c0_i32_1 : i32, i32, i32
  }
  func.func @transform_5(%arg0: i32) -> (i32, i32) {
    %c0_i32 = arith.constant 0 : i32
    %c0_i32_0 = arith.constant 0 : i32
    %c0_i32_1 = arith.constant 0 : i32
    return %c0_i32, %c0_i32_0 : i32, i32
  }
  func.func @transform_6(%arg0: i32) -> (i32, i32, i32) {
    %c0_i32 = arith.constant 0 : i32
    %c0_i32_0 = arith.constant 0 : i32
    %c0_i32_1 = arith.constant 0 : i32
    return %arg0, %c0_i32, %c0_i32_0 : i32, i32, i32
  }
  func.func @transform_7(%arg0: i32) -> (i32, i32, i32) {
    %c0_i32 = arith.constant 0 : i32
    %c0_i32_0 = arith.constant 0 : i32
    %c0_i32_1 = arith.constant 0 : i32
    return %arg0, %c0_i32, %c0_i32_0 : i32, i32, i32
  }
  func.func @transform_8(%arg0: i32) -> (i32, i32, i32) {
    %c0_i32 = arith.constant 0 : i32
    %c0_i32_0 = arith.constant 0 : i32
    %c0_i32_1 = arith.constant 0 : i32
    return %arg0, %c0_i32, %c0_i32_0 : i32, i32, i32
  }
  func.func @transform_9(%arg0: i32) -> (i32, i32, i32) {
    %c0_i32 = arith.constant 0 : i32
    %c0_i32_0 = arith.constant 0 : i32
    %c0_i32_1 = arith.constant 0 : i32
    return %arg0, %c0_i32, %c0_i32_0 : i32, i32, i32
  }
  func.func @transform_10(%arg0: i32) -> (i32, i32, i32) {
    %c0_i32 = arith.constant 0 : i32
    %c0_i32_0 = arith.constant 0 : i32
    %c0_i32_1 = arith.constant 0 : i32
    return %arg0, %c0_i32, %c0_i32_0 : i32, i32, i32
  }
}

</mosaic_0001>

<llo_original>
// kernel: tpu_custom_call.1
$region0: #{tpu_custom_call.1}
  #allocation0 [shape = 'u32[]', space=smem, size = 0x4, offset = 0x4, fixed_abs, tag = 'smem constant byte address 0x4 - core index']
  #allocation1 [shape = 'u32[144,128]{1,0:T(1,128)}', space=vmem, size = 0x12000, scoped, tag = 'internal scratch']
  %s0 = inlined_call_operand.vmem [shape: f32[4,64,4], index: 0, kind: input, shape index: {}]
  %s1 = inlined_call_operand.vmem [shape: f32[4,1,4], index: 1, kind: input, shape index: {}]
  %s2 = inlined_call_operand.vmem [shape: f32[4,64,4], index: 2, kind: input, shape index: {}]
  %s3 = inlined_call_operand.vmem [shape: f32[4,64,1], index: 3, kind: input, shape index: {}]
  %s4 = inlined_call_operand.vmem [shape: f32[4,64,64], index: 4, kind: input, shape index: {}]
  %s5 = inlined_call_operand.vmem [shape: f32[1,64], index: 5, kind: input, shape index: {}]
  %s6 = inlined_call_operand.vmem [shape: f32[2,64,256], index: 6, kind: input, shape index: {}]
  %s7 = inlined_call_operand.vmem [shape: f32[2,64,256], index: 7, kind: input, shape index: {}]
  %s8 = inlined_call_operand.hbm [shape: f32[2,64,256], index: 8, kind: input, shape index: {}]
  %s9 = inlined_call_operand.hbm [shape: f32[2,64,256], index: 9, kind: input, shape index: {}]
  %s10 = inlined_call_operand.hbm [shape: f32[2,64,256], index: 10, kind: output, shape index: {}]
  %s11 = sld [smem:[#allocation0]]
  $region81: #{tpu_custom_call.1} parent=0
    _
  %s13 = ssub.s32 1, %s11
  %s14 = scalar_select 0, %s13, %s11
  $region1: #{tpu_custom_call.1} parent=0
    #allocation2 [shape = 'u8[131072]{0}', space=vmem, size = 0x20000, scoped, tag = 'input window, operand 8']
    #allocation3 [shape = 's32[2]{0}', space=sflag, size = 0x8, scoped, tag = 'scoped memory for tpu_custom_call.1']
    #allocation4 [shape = 's32[2]{0}', space=sflag, size = 0x8, scoped, tag = 'scoped memory for tpu_custom_call.1']
    #allocation5 [shape = 'u8[131072]{0}', space=vmem, size = 0x20000, scoped, tag = 'input window, operand 9']
    #allocation6 [shape = 's32[2]{0}', space=sflag, size = 0x8, scoped, tag = 'scoped memory for tpu_custom_call.1']
    #allocation7 [shape = 'u8[131072]{0}', space=vmem, size = 0x20000, scoped, tag = 'output window, operand 0']
    %15 = vsyncpa [#allocation3], 0
    %s16 = scalar_lea.sflag [#allocation3], 1
    %17 = vsyncpa %s16, 0
    %18 = vsyncpa [#allocation6], 0
    %s19 = scalar_lea.sflag [#allocation6], 1
    %20 = vsyncpa %s19, 0
    %21 = vsyncpa [#allocation4], 0
    %s22 = scalar_lea.sflag [#allocation4], 1
    %23 = vsyncpa %s22, 0
    loop: start=0, step=1, limit=4
    $region2: #{tpu_custom_call.1} parent=1 // loop_pre_header
      _
    $region3: #{tpu_custom_call.1} parent=1 // loop_header
      %s25 = sphi 0, %s29
      %p26 = scmp.ge.s32.totalorder %s25, 4
      %s33 = sphi 0, %s33
      %s35 = sphi 0, %s33
      %s36 = sphi 0, %s35
      %s50 = sphi 0, %s36
      %s54 = sphi 0, %s54
      %s56 = sphi 0, %s54
      %s57 = sphi 0, %s56
      %s71 = sphi 0, %s57
      %s75 = sphi 0, %s75
      %s77 = sphi 0, %s75
      %s78 = sphi 0, %s77
      %s92 = sphi 0, %s78
      %s96 = sphi 0, %s96
      %s98 = sphi 0, %s96
      %s99 = sphi 0, %s98
      %s113 = sphi 0, %s99
      %s117 = sphi 0, %s117
      %s119 = sphi 0, %s117
      %s120 = sphi 0, %s119
      %s134 = sphi 0, %s120
      %s138 = sphi 0, %s138
      %s140 = sphi 0, %s138
      %s141 = sphi 0, %s140
      %s155 = sphi 0, %s141
      %s161 = sphi 0, %s163
      %s164 = sphi 0, %s161
      %s165 = sphi 0, %s164
      %s181 = sphi 0, %s165
      %s187 = sphi 0, %s189
      %s190 = sphi 0, %s187
      %s191 = sphi 0, %s190
      %s207 = sphi 0, %s191
      %s213 = sphi 0, %s215
      %s216 = sphi 0, %s213
      %s217 = sphi 0, %s216
      %s233 = sphi 0, %s217
      %s239 = sphi 0, %s241
      %s242 = sphi 0, %s239
      %s243 = sphi 0, %s242
      %s259 = sphi 0, %s243
      %s265 = sphi 0, %s267
      %s268 = sphi 0, %s265
      %s269 = sphi 0, %s268
      %s285 = sphi 0, %s269
    $region4: #{tpu_custom_call.1} parent=1 // loop_header_branch
      %28 = sbr.rel (%p26) target = $region8
    $region5: #{tpu_custom_call.1} parent=1 // loop_body
      %s30 = ssub.s32 %s25, 1
      %s31 = ssub.s32 %s25, 2
      %s32 = sadd.s32 %s25, 1
      %s34 = sadd.s32 %s33, 1
      %p37 = scmp.eq.s32.totalorder %s25, 1
      %p38 = scmp.ne.s32.totalorder %s33, %s35
      %p39 = scmp.eq.s32.totalorder %s25, 0
      %p40 = por %p38, %p39
      %p41 = scmp.ne.s32.totalorder %s33, %s35
      %p42 = scmp.eq.s32.totalorder %s30, 1
      %p43 = por %p41, %p42
      %p44 = scmp.ne.s32.totalorder %s35, %s36
      %p45 = scmp.eq.s32.totalorder %s30, 0
      %p46 = por %p44, %p45
      %p47 = scmp.ne.s32.totalorder %s35, %s36
      %p48 = scmp.eq.s32.totalorder %s31, 1
      %p49 = por %p47, %p48
      %p51 = scmp.ne.s32.totalorder %s36, %s50
      %p52 = scmp.eq.s32.totalorder %s31, 0
      %p53 = por %p51, %p52
      %s55 = sadd.s32 %s54, 1
      %p58 = scmp.eq.s32.totalorder %s25, 1
      %p59 = scmp.ne.s32.totalorder %s54, %s56
      %p60 = scmp.eq.s32.totalorder %s25, 0
      %p61 = por %p59, %p60
      %p62 = scmp.ne.s32.totalorder %s54, %s56
      %p63 = scmp.eq.s32.totalorder %s30, 1
      %p64 = por %p62, %p63
      %p65 = scmp.ne.s32.totalorder %s56, %s57
      %p66 = scmp.eq.s32.totalorder %s30, 0
      %p67 = por %p65, %p66
      %p68 = scmp.ne.s32.totalorder %s56, %s57
      %p69 = scmp.eq.s32.totalorder %s31, 1
      %p70 = por %p68, %p69
      %p72 = scmp.ne.s32.totalorder %s57, %s71
      %p73 = scmp.eq.s32.totalorder %s31, 0
      %p74 = por %p72, %p73
      %s76 = sadd.s32 %s75, 1
      %p79 = scmp.eq.s32.totalorder %s25, 1
      %p80 = scmp.ne.s32.totalorder %s75, %s77
      %p81 = scmp.eq.s32.totalorder %s25, 0
      %p82 = por %p80, %p81
      %p83 = scmp.ne.s32.totalorder %s75, %s77
      %p84 = scmp.eq.s32.totalorder %s30, 1
      %p85 = por %p83, %p84
      %p86 = scmp.ne.s32.totalorder %s77, %s78
      %p87 = scmp.eq.s32.totalorder %s30, 0
      %p88 = por %p86, %p87
      %p89 = scmp.ne.s32.totalorder %s77, %s78
      %p90 = scmp.eq.s32.totalorder %s31, 1
      %p91 = por %p89, %p90
      %p93 = scmp.ne.s32.totalorder %s78, %s92
      %p94 = scmp.eq.s32.totalorder %s31, 0
      %p95 = por %p93, %p94
      %s97 = sadd.s32 %s96, 1
      %p100 = scmp.eq.s32.totalorder %s25, 1
      %p101 = scmp.ne.s32.totalorder %s96, %s98
      %p102 = scmp.eq.s32.totalorder %s25, 0
      %p103 = por %p101, %p102
      %p104 = scmp.ne.s32.totalorder %s96, %s98
      %p105 = scmp.eq.s32.totalorder %s30, 1
      %p106 = por %p104, %p105
      %p107 = scmp.ne.s32.totalorder %s98, %s99
      %p108 = scmp.eq.s32.totalorder %s30, 0
      %p109 = por %p107, %p108
      %p110 = scmp.ne.s32.totalorder %s98, %s99
      %p111 = scmp.eq.s32.totalorder %s31, 1
      %p112 = por %p110, %p111
      %p114 = scmp.ne.s32.totalorder %s99, %s113
      %p115 = scmp.eq.s32.totalorder %s31, 0
      %p116 = por %p114, %p115
      %s118 = sadd.s32 %s117, 1
      %p121 = scmp.eq.s32.totalorder %s25, 1
      %p122 = scmp.ne.s32.totalorder %s117, %s119
      %p123 = scmp.eq.s32.totalorder %s25, 0
      %p124 = por %p122, %p123
      %p125 = scmp.ne.s32.totalorder %s117, %s119
      %p126 = scmp.eq.s32.totalorder %s30, 1
      %p127 = por %p125, %p126
      %p128 = scmp.ne.s32.totalorder %s119, %s120
      %p129 = scmp.eq.s32.totalorder %s30, 0
      %p130 = por %p128, %p129
      %p131 = scmp.ne.s32.totalorder %s119, %s120
      %p132 = scmp.eq.s32.totalorder %s31, 1
      %p133 = por %p131, %p132
      %p135 = scmp.ne.s32.totalorder %s120, %s134
      %p136 = scmp.eq.s32.totalorder %s31, 0
      %p137 = por %p135, %p136
      %s139 = sadd.s32 %s138, 1
      %p142 = scmp.eq.s32.totalorder %s25, 1
      %p143 = scmp.ne.s32.totalorder %s138, %s140
      %p144 = scmp.eq.s32.totalorder %s25, 0
      %p145 = por %p143, %p144
      %p146 = scmp.ne.s32.totalorder %s138, %s140
      %p147 = scmp.eq.s32.totalorder %s30, 1
      %p148 = por %p146, %p147
      %p149 = scmp.ne.s32.totalorder %s140, %s141
      %p150 = scmp.eq.s32.totalorder %s30, 0
      %p151 = por %p149, %p150
      %p152 = scmp.ne.s32.totalorder %s140, %s141
      %p153 = scmp.eq.s32.totalorder %s31, 1
      %p154 = por %p152, %p153
      %p156 = scmp.ne.s32.totalorder %s141, %s155
      %p157 = scmp.eq.s32.totalorder %s31, 0
      %p158 = por %p156, %p157
      %s159 = ssub.s32 %s25, %s32
      %p160 = scmp.eq.s32.totalorder %s159, 0
      %s162 = sadd.s32 %s161, 1
      %s163 = scalar_select %p160, %s161, %s162
      %p166 = pneg %p160
      %p167 = scmp.eq.s32.totalorder %s25, 1
      %p168 = por %p166, %p167
      %p169 = scmp.ne.s32.totalorder %s161, %s164
      %p170 = scmp.eq.s32.totalorder %s25, 0
      %p171 = por %p169, %p170
      %p172 = scmp.ne.s32.totalorder %s161, %s164
      %p173 = scmp.eq.s32.totalorder %s30, 1
      %p174 = por %p172, %p173
      %p175 = scmp.ne.s32.totalorder %s164, %s165
      %p176 = scmp.eq.s32.totalorder %s30, 0
      %p177 = por %p175, %p176
      %p178 = scmp.ne.s32.totalorder %s164, %s165
      %p179 = scmp.eq.s32.totalorder %s31, 1
      %p180 = por %p178, %p179
      %p182 = scmp.ne.s32.totalorder %s165, %s181
      %p183 = scmp.eq.s32.totalorder %s31, 0
      %p184 = por %p182, %p183
      %s185 = ssub.s32 %s25, %s32
      %p186 = scmp.eq.s32.totalorder %s185, 0
      %s188 = sadd.s32 %s187, 1
      %s189 = scalar_select %p186, %s187, %s188
      %p192 = pneg %p186
      %p193 = scmp.eq.s32.totalorder %s25, 1
      %p194 = por %p192, %p193
      %p195 = scmp.ne.s32.totalorder %s187, %s190
      %p196 = scmp.eq.s32.totalorder %s25, 0
      %p197 = por %p195, %p196
      %p198 = scmp.ne.s32.totalorder %s187, %s190
      %p199 = scmp.eq.s32.totalorder %s30, 1
      %p200 = por %p198, %p199
      %p201 = scmp.ne.s32.totalorder %s190, %s191
      %p202 = scmp.eq.s32.totalorder %s30, 0
      %p203 = por %p201, %p202
      %p204 = scmp.ne.s32.totalorder %s190, %s191
      %p205 = scmp.eq.s32.totalorder %s31, 1
      %p206 = por %p204, %p205
      %p208 = scmp.ne.s32.totalorder %s191, %s207
      %p209 = scmp.eq.s32.totalorder %s31, 0
      %p210 = por %p208, %p209
      %s211 = ssub.s32 %s25, %s32
      %p212 = scmp.eq.s32.totalorder %s211, 0
      %s214 = sadd.s32 %s213, 1
      %s215 = scalar_select %p212, %s213, %s214
      %p218 = pneg %p212
      %p219 = scmp.eq.s32.totalorder %s25, 1
      %p220 = por %p218, %p219
      %p221 = scmp.ne.s32.totalorder %s213, %s216
      %p222 = scmp.eq.s32.totalorder %s25, 0
      %p223 = por %p221, %p222
      %p224 = scmp.ne.s32.totalorder %s213, %s216
      %p225 = scmp.eq.s32.totalorder %s30, 1
      %p226 = por %p224, %p225
      %p227 = scmp.ne.s32.totalorder %s216, %s217
      %p228 = scmp.eq.s32.totalorder %s30, 0
      %p229 = por %p227, %p228
      %p230 = scmp.ne.s32.totalorder %s216, %s217
      %p231 = scmp.eq.s32.totalorder %s31, 1
      %p232 = por %p230, %p231
      %p234 = scmp.ne.s32.totalorder %s217, %s233
      %p235 = scmp.eq.s32.totalorder %s31, 0
      %p236 = por %p234, %p235
      %s237 = ssub.s32 %s25, %s32
      %p238 = scmp.eq.s32.totalorder %s237, 0
      %s240 = sadd.s32 %s239, 1
      %s241 = scalar_select %p238, %s239, %s240
      %p244 = pneg %p238
      %p245 = scmp.eq.s32.totalorder %s25, 1
      %p246 = por %p244, %p245
      %p247 = scmp.ne.s32.totalorder %s239, %s242
      %p248 = scmp.eq.s32.totalorder %s25, 0
      %p249 = por %p247, %p248
      %p250 = scmp.ne.s32.totalorder %s239, %s242
      %p251 = scmp.eq.s32.totalorder %s30, 1
      %p252 = por %p250, %p251
      %p253 = scmp.ne.s32.totalorder %s242, %s243
      %p254 = scmp.eq.s32.totalorder %s30, 0
      %p255 = por %p253, %p254
      %p256 = scmp.ne.s32.totalorder %s242, %s243
      %p257 = scmp.eq.s32.totalorder %s31, 1
      %p258 = por %p256, %p257
      %p260 = scmp.ne.s32.totalorder %s243, %s259
      %p261 = scmp.eq.s32.totalorder %s31, 0
      %p262 = por %p260, %p261
      %s263 = ssub.s32 %s25, %s32
      %p264 = scmp.eq.s32.totalorder %s263, 0
      %s266 = sadd.s32 %s265, 1
      %s267 = scalar_select %p264, %s265, %s266
      %p270 = pneg %p264
      %p271 = scmp.eq.s32.totalorder %s25, 1
      %p272 = por %p270, %p271
      %p273 = scmp.ne.s32.totalorder %s265, %s268
      %p274 = scmp.eq.s32.totalorder %s25, 0
      %p275 = por %p273, %p274
      %p276 = scmp.ne.s32.totalorder %s265, %s268
      %p277 = scmp.eq.s32.totalorder %s30, 1
      %p278 = por %p276, %p277
      %p279 = scmp.ne.s32.totalorder %s268, %s269
      %p280 = scmp.eq.s32.totalorder %s30, 0
      %p281 = por %p279, %p280
      %p282 = scmp.ne.s32.totalorder %s268, %s269
      %p283 = scmp.eq.s32.totalorder %s31, 1
      %p284 = por %p282, %p283
      %p286 = scmp.ne.s32.totalorder %s269, %s285
      %p287 = scmp.eq.s32.totalorder %s31, 0
      %p288 = por %p286, %p287
      %p289 = scmp.le.s32.totalorder 1, %s25
      %p290 = scmp.lt.s32.totalorder %s25, 3
      %p291 = pnand %p289, %p290
      %p292 = pneg %p291
      // Predicated region
      $region9: #{tpu_custom_call.1} parent=5 // pred_check
        _
      $region10: #{tpu_custom_call.1} parent=5 // pred_check_branch
        %294 = sbr.rel (%p291) target = $region12
      $region11: #{tpu_custom_call.1} parent=5 // pred_region
        %s295 = ssub.s32 %s25, 1
        // Predicated region
        $region13: #{tpu_custom_call.1} parent=11 // pred_check
          %p296 = pneg %p46
        $region14: #{tpu_custom_call.1} parent=11 // pred_check_branch
          %298 = sbr.rel (%p296) target = $region16
        $region15: #{tpu_custom_call.1} parent=11 // pred_region
          _
        $region16: #{tpu_custom_call.1} parent=11 // pred_fallthru
          _
        // Predicated region
        $region17: #{tpu_custom_call.1} parent=11 // pred_check
          %p299 = pneg %p67
        $region18: #{tpu_custom_call.1} parent=11 // pred_check_branch
          %301 = sbr.rel (%p299) target = $region20
        $region19: #{tpu_custom_call.1} parent=11 // pred_region
          _
        $region20: #{tpu_custom_call.1} parent=11 // pred_fallthru
          _
        // Predicated region
        $region21: #{tpu_custom_call.1} parent=11 // pred_check
          %p302 = pneg %p88
        $region22: #{tpu_custom_call.1} parent=11 // pred_check_branch
          %304 = sbr.rel (%p302) target = $region24
        $region23: #{tpu_custom_call.1} parent=11 // pred_region
          _
        $region24: #{tpu_custom_call.1} parent=11 // pred_fallthru
          _
        // Predicated region
        $region25: #{tpu_custom_call.1} parent=11 // pred_check
          %p305 = pneg %p109
        $region26: #{tpu_custom_call.1} parent=11 // pred_check_branch
          %307 = sbr.rel (%p305) target = $region28
        $region27: #{tpu_custom_call.1} parent=11 // pred_region
          _
        $region28: #{tpu_custom_call.1} parent=11 // pred_fallthru
          _
        // Predicated region
        $region29: #{tpu_custom_call.1} parent=11 // pred_check
          %p308 = pneg %p130
        $region30: #{tpu_custom_call.1} parent=11 // pred_check_branch
          %310 = sbr.rel (%p308) target = $region32
        $region31: #{tpu_custom_call.1} parent=11 // pred_region
          _
        $region32: #{tpu_custom_call.1} parent=11 // pred_fallthru
          _
        // Predicated region
        $region33: #{tpu_custom_call.1} parent=11 // pred_check
          %p311 = pneg %p151
        $region34: #{tpu_custom_call.1} parent=11 // pred_check_branch
          %313 = sbr.rel (%p311) target = $region36
        $region35: #{tpu_custom_call.1} parent=11 // pred_region
          _
        $region36: #{tpu_custom_call.1} parent=11 // pred_fallthru
          _
      $region12: #{tpu_custom_call.1} parent=5 // pred_fallthru
        _
      %p314 = scmp.lt.s32.totalorder %s25, 2
      // Predicated region
      $region37: #{tpu_custom_call.1} parent=5 // pred_check
        %p315 = pneg %p314
      $region38: #{tpu_custom_call.1} parent=5 // pred_check_branch
        %317 = sbr.rel (%p315) target = $region40
      $region39: #{tpu_custom_call.1} parent=5 // pred_region
        // Predicated region
        $region41: #{tpu_custom_call.1} parent=39 // pred_check
          %p318 = pneg %p171
        $region42: #{tpu_custom_call.1} parent=39 // pred_check_branch
          %320 = sbr.rel (%p318) target = $region44
        $region43: #{tpu_custom_call.1} parent=39 // pred_region
          %p321 = scmp.lt.s32.totalorder %s25, 1
          %s322 = scalar_select %p321, %s25, 1
          %s323 = smul.addr %s322, 16
          %s324 = smul.addr %s323, 8
          %s325 = scalar_lea.vmem %s6, %s324
        $region44: #{tpu_custom_call.1} parent=39 // pred_fallthru
          _
        // Predicated region
        $region45: #{tpu_custom_call.1} parent=39 // pred_check
          %p326 = pneg %p197
        $region46: #{tpu_custom_call.1} parent=39 // pred_check_branch
          %328 = sbr.rel (%p326) target = $region48
        $region47: #{tpu_custom_call.1} parent=39 // pred_region
          %p329 = scmp.lt.s32.totalorder %s25, 1
          %s330 = scalar_select %p329, %s25, 1
          %s331 = smul.addr %s330, 16
          %s332 = smul.addr %s331, 8
          %s333 = scalar_lea.vmem %s7, %s332
        $region48: #{tpu_custom_call.1} parent=39 // pred_fallthru
          _
        // Predicated region
        $region49: #{tpu_custom_call.1} parent=39 // pred_check
          %p334 = pneg %p223
        $region50: #{tpu_custom_call.1} parent=39 // pred_check_branch
          %336 = sbr.rel (%p334) target = $region52
        $region51: #{tpu_custom_call.1} parent=39 // pred_region
          %s337 = sand.u32 %s213, 1
          %s338 = scalar_lea.sflag [#allocation3], %s337
          %s339 = sand.u32 %s213, 1
          %s340 = smul.addr %s339, 128
          %s341 = scalar_lea.vmem [#allocation2], %s340
          %s343 = ssub.s32 2048, 2048
          %344 = vsyncadd %s338, %s343
          %s345 = smul.addr %s25, 16
          %s346 = smul.addr %s345, 128
          %s347 = scalar_lea.hbm %s8, %s346
          %s348 = sshll.u32 %s341, 4
          %s349 = int_to_ptr.vmem [resolvable:$true] %s348
          %354 = dma.hbm_to_vmem [thread:$0]  %s347, 2048, %s349, %s338, 256, 256, 16
        $region52: #{tpu_custom_call.1} parent=39 // pred_fallthru
          _
        // Predicated region
        $region53: #{tpu_custom_call.1} parent=39 // pred_check
          %p355 = pneg %p249
        $region54: #{tpu_custom_call.1} parent=39 // pred_check_branch
          %357 = sbr.rel (%p355) target = $region56
        $region55: #{tpu_custom_call.1} parent=39 // pred_region
          %s358 = sand.u32 %s239, 1
          %s359 = scalar_lea.sflag [#allocation6], %s358
          %s360 = sand.u32 %s239, 1
          %s361 = smul.addr %s360, 128
          %s362 = scalar_lea.vmem [#allocation5], %s361
          %s364 = ssub.s32 2048, 2048
          %365 = vsyncadd %s359, %s364
          %s366 = smul.addr %s25, 16
          %s367 = smul.addr %s366, 128
          %s368 = scalar_lea.hbm %s9, %s367
          %s369 = sshll.u32 %s362, 4
          %s370 = int_to_ptr.vmem [resolvable:$true] %s369
          %375 = dma.hbm_to_vmem [thread:$0]  %s368, 2048, %s370, %s359, 256, 256, 16
        $region56: #{tpu_custom_call.1} parent=39 // pred_fallthru
          _
      $region40: #{tpu_custom_call.1} parent=5 // pred_fallthru
        _
      %p376 = scmp.le.s32.totalorder 1, %s25
      %p377 = scmp.lt.s32.totalorder %s25, 3
      %p378 = pnand %p376, %p377
      %p379 = pneg %p378
      // Predicated region
      $region57: #{tpu_custom_call.1} parent=5 // pred_check
        _
      $region58: #{tpu_custom_call.1} parent=5 // pred_check_branch
        %381 = sbr.rel (%p378) target = $region60
      $region59: #{tpu_custom_call.1} parent=5 // pred_region
        %s382 = ssub.s32 %s25, 1
        %s383 = sand.u32 %s216, 1
        %s384 = scalar_lea.sflag [#allocation3], %s383
        %s385 = sand.u32 %s216, 1
        %s386 = smul.addr %s385, 128
        %s387 = scalar_lea.vmem [#allocation2], %s386
        // Predicated region
        $region61: #{tpu_custom_call.1} parent=59 // pred_check
          %p388 = pneg %p229
        $region62: #{tpu_custom_call.1} parent=59 // pred_check_branch
          %390 = sbr.rel (%p388) target = $region64
        $region63: #{tpu_custom_call.1} parent=59 // pred_region
          %391 = dma.done %s384, 2048
        $region64: #{tpu_custom_call.1} parent=59 // pred_fallthru
          _
        %s392 = sand.u32 %s242, 1
        %s393 = scalar_lea.sflag [#allocation6], %s392
        %s394 = sand.u32 %s242, 1
        %s395 = smul.addr %s394, 128
        %s396 = scalar_lea.vmem [#allocation5], %s395
        // Predicated region
        $region65: #{tpu_custom_call.1} parent=59 // pred_check
          %p397 = pneg %p255
        $region66: #{tpu_custom_call.1} parent=59 // pred_check_branch
          %399 = sbr.rel (%p397) target = $region68
        $region67: #{tpu_custom_call.1} parent=59 // pred_region
          %400 = dma.done %s393, 2048
        $region68: #{tpu_custom_call.1} parent=59 // pred_fallthru
          _
        %p401 = pneg %p46
        %p402 = pneg %p43
        %p403 = pneg %p67
        %p404 = pneg %p64
        %p405 = pneg %p88
        %p406 = pneg %p85
        %p407 = pneg %p109
        %p408 = pneg %p106
        %p409 = pneg %p130
        %p410 = pneg %p127
        %p411 = pneg %p151
        %p412 = pneg %p148
        %p413 = scmp.lt.s32.totalorder %s30, 1
        %s414 = scalar_select %p413, %s30, 1
        %s415 = smul.addr %s414, 16
        %s416 = smul.addr %s415, 8
        %s417 = scalar_lea.vmem %s6, %s416
        %p418 = pneg %p177
        %p419 = pneg %p174
        %p420 = scmp.lt.s32.totalorder %s30, 1
        %s421 = scalar_select %p420, %s30, 1
        %s422 = smul.addr %s421, 16
        %s423 = smul.addr %s422, 8
        %s424 = scalar_lea.vmem %s7, %s423
        %p425 = pneg %p203
        %p426 = pneg %p200
        %s427 = sand.u32 %s216, 1
        %s428 = scalar_lea.sflag [#allocation3], %s427
        %s429 = sand.u32 %s216, 1
        %s430 = smul.addr %s429, 128
        %s431 = scalar_lea.vmem [#allocation2], %s430
        %p432 = pneg %p229
        %p433 = pneg %p226
        %s434 = sand.u32 %s242, 1
        %s435 = scalar_lea.sflag [#allocation6], %s434
        %s436 = sand.u32 %s242, 1
        %s437 = smul.addr %s436, 128
        %s438 = scalar_lea.vmem [#allocation5], %s437
        %p439 = pneg %p255
        %p440 = pneg %p252
        %p441 = pneg %p281
        %p442 = pneg %p278
        %s443 = sand.u32 %s268, 1
        %s444 = scalar_lea.sflag [#allocation4], %s443
        %s445 = sand.u32 %s268, 1
        %s446 = smul.addr %s445, 128
        %s447 = scalar_lea.vmem [#allocation7], %s446
        %p448 = scmp.lt.s32.totalorder %s30, 1
        %s449 = scalar_select %p448, %s30, 1
        %s450 = smul.addr %s449, 16
        %s451 = smul.addr %s450, 8
        %s452 = scalar_lea.vmem %s6, %s451
        %p453 = scmp.lt.s32.totalorder %s30, 1
        %s454 = scalar_select %p453, %s30, 1
        %s455 = smul.addr %s454, 16
        %s456 = smul.addr %s455, 8
        %s457 = scalar_lea.vmem %s7, %s456
        %v458 = vld [vmem:[%s452] sm:$0xff]
        %v459 = vld [vmem:[%s452 + $0x8] sm:$0xff]
        %v460 = vld [vmem:[%s452 + $0x10] sm:$0xff]
        %v461 = vld [vmem:[%s452 + $0x18] sm:$0xff]
        %v462 = vld [vmem:[%s452 + $0x20] sm:$0xff]
        %v463 = vld [vmem:[%s452 + $0x28] sm:$0xff]
        %v464 = vld [vmem:[%s452 + $0x30] sm:$0xff]
        %v465 = vld [vmem:[%s452 + $0x38] sm:$0xff]
        %v466 = vld [vmem:[%s452 + $0x40] sm:$0xff]
        %v467 = vld [vmem:[%s452 + $0x48] sm:$0xff]
        %v468 = vld [vmem:[%s452 + $0x50] sm:$0xff]
        %v469 = vld [vmem:[%s452 + $0x58] sm:$0xff]
        %v470 = vld [vmem:[%s452 + $0x60] sm:$0xff]
        %v471 = vld [vmem:[%s452 + $0x68] sm:$0xff]
        %v472 = vld [vmem:[%s452 + $0x70] sm:$0xff]
        %v473 = vld [vmem:[%s452 + $0x78] sm:$0xff]
        %v474 = vadd.f32 %v458, %v459
        %475 = vadd.xlane.f32.xlu0 %v474
        %v476 = vpop.xlane.xlu0 %475
        %v477 = vadd.f32 %v460, %v461
        %478 = vadd.xlane.f32.xlu0 %v477
        %v479 = vpop.xlane.xlu0 %478
        %v480 = vadd.f32 %v462, %v463
        %481 = vadd.xlane.f32.xlu0 %v480
        %v482 = vpop.xlane.xlu0 %481
        %v483 = vadd.f32 %v464, %v465
        %484 = vadd.xlane.f32.xlu0 %v483
        %v485 = vpop.xlane.xlu0 %484
        %v486 = vadd.f32 %v466, %v467
        %487 = vadd.xlane.f32.xlu0 %v486
        %v488 = vpop.xlane.xlu0 %487
        %v489 = vadd.f32 %v468, %v469
        %490 = vadd.xlane.f32.xlu0 %v489
        %v491 = vpop.xlane.xlu0 %490
        %v492 = vadd.f32 %v470, %v471
        %493 = vadd.xlane.f32.xlu0 %v492
        %v494 = vpop.xlane.xlu0 %493
        %v495 = vadd.f32 %v472, %v473
        %496 = vadd.xlane.f32.xlu0 %v495
        %v497 = vpop.xlane.xlu0 %496
        %v498 = vmul.f32 %v476, 0.00390625
        %v499 = vmul.f32 %v479, 0.00390625
        %v500 = vmul.f32 %v482, 0.00390625
        %v501 = vmul.f32 %v485, 0.00390625
        %v502 = vmul.f32 %v488, 0.00390625
        %v503 = vmul.f32 %v491, 0.00390625
        %v504 = vmul.f32 %v494, 0.00390625
        %v505 = vmul.f32 %v497, 0.00390625
        %v506 = vld [vmem:[%s457] sm:$0xff]
        %v507 = vld [vmem:[%s457 + $0x8] sm:$0xff]
        %v508 = vld [vmem:[%s457 + $0x10] sm:$0xff]
        %v509 = vld [vmem:[%s457 + $0x18] sm:$0xff]
        %v510 = vld [vmem:[%s457 + $0x20] sm:$0xff]
        %v511 = vld [vmem:[%s457 + $0x28] sm:$0xff]
        %v512 = vld [vmem:[%s457 + $0x30] sm:$0xff]
        %v513 = vld [vmem:[%s457 + $0x38] sm:$0xff]
        %v514 = vld [vmem:[%s457 + $0x40] sm:$0xff]
        %v515 = vld [vmem:[%s457 + $0x48] sm:$0xff]
        %v516 = vld [vmem:[%s457 + $0x50] sm:$0xff]
        %v517 = vld [vmem:[%s457 + $0x58] sm:$0xff]
        %v518 = vld [vmem:[%s457 + $0x60] sm:$0xff]
        %v519 = vld [vmem:[%s457 + $0x68] sm:$0xff]
        %v520 = vld [vmem:[%s457 + $0x70] sm:$0xff]
        %v521 = vld [vmem:[%s457 + $0x78] sm:$0xff]
        %v522 = vadd.f32 %v506, %v507
        %523 = vadd.xlane.f32.xlu0 %v522
        %v524 = vpop.xlane.xlu0 %523
        %v525 = vadd.f32 %v508, %v509
        %526 = vadd.xlane.f32.xlu0 %v525
        %v527 = vpop.xlane.xlu0 %526
        %v528 = vadd.f32 %v510, %v511
        %529 = vadd.xlane.f32.xlu0 %v528
        %v530 = vpop.xlane.xlu0 %529
        %v531 = vadd.f32 %v512, %v513
        %532 = vadd.xlane.f32.xlu0 %v531
        %v533 = vpop.xlane.xlu0 %532
        %v534 = vadd.f32 %v514, %v515
        %535 = vadd.xlane.f32.xlu0 %v534
        %v536 = vpop.xlane.xlu0 %535
        %v537 = vadd.f32 %v516, %v517
        %538 = vadd.xlane.f32.xlu0 %v537
        %v539 = vpop.xlane.xlu0 %538
        %v540 = vadd.f32 %v518, %v519
        %541 = vadd.xlane.f32.xlu0 %v540
        %v542 = vpop.xlane.xlu0 %541
        %v543 = vadd.f32 %v520, %v521
        %544 = vadd.xlane.f32.xlu0 %v543
        %v545 = vpop.xlane.xlu0 %544
        %v546 = vmul.f32 %v524, 0.00390625
        %v547 = vmul.f32 %v527, 0.00390625
        %v548 = vmul.f32 %v530, 0.00390625
        %v549 = vmul.f32 %v533, 0.00390625
        %v550 = vmul.f32 %v536, 0.00390625
        %v551 = vmul.f32 %v539, 0.00390625
        %v552 = vmul.f32 %v542, 0.00390625
        %v553 = vmul.f32 %v545, 0.00390625
        %v554 = vld [vmem:[%s387] sm:$0xff]
        %v555 = vld [vmem:[%s387 + $0x8] sm:$0xff]
        %v556 = vld [vmem:[%s387 + $0x10] sm:$0xff]
        %v557 = vld [vmem:[%s387 + $0x18] sm:$0xff]
        %v558 = vld [vmem:[%s387 + $0x20] sm:$0xff]
        %v559 = vld [vmem:[%s387 + $0x28] sm:$0xff]
        %v560 = vld [vmem:[%s387 + $0x30] sm:$0xff]
        %v561 = vld [vmem:[%s387 + $0x38] sm:$0xff]
        %v562 = vld [vmem:[%s387 + $0x40] sm:$0xff]
        %v563 = vld [vmem:[%s387 + $0x48] sm:$0xff]
        %v564 = vld [vmem:[%s387 + $0x50] sm:$0xff]
        %v565 = vld [vmem:[%s387 + $0x58] sm:$0xff]
        %v566 = vld [vmem:[%s387 + $0x60] sm:$0xff]
        %v567 = vld [vmem:[%s387 + $0x68] sm:$0xff]
        %v568 = vld [vmem:[%s387 + $0x70] sm:$0xff]
        %v569 = vld [vmem:[%s387 + $0x78] sm:$0xff]
        %v570 = vadd.f32 %v554, %v555
        %571 = vadd.xlane.f32.xlu0 %v570
        %v572 = vpop.xlane.xlu0 %571
        %v573 = vadd.f32 %v556, %v557
        %574 = vadd.xlane.f32.xlu0 %v573
        %v575 = vpop.xlane.xlu0 %574
        %v576 = vadd.f32 %v558, %v559
        %577 = vadd.xlane.f32.xlu0 %v576
        %v578 = vpop.xlane.xlu0 %577
        %v579 = vadd.f32 %v560, %v561
        %580 = vadd.xlane.f32.xlu0 %v579
        %v581 = vpop.xlane.xlu0 %580
        %v582 = vadd.f32 %v562, %v563
        %583 = vadd.xlane.f32.xlu0 %v582
        %v584 = vpop.xlane.xlu0 %583
        %v585 = vadd.f32 %v564, %v565
        %586 = vadd.xlane.f32.xlu0 %v585
        %v587 = vpop.xlane.xlu0 %586
        %v588 = vadd.f32 %v566, %v567
        %589 = vadd.xlane.f32.xlu0 %v588
        %v590 = vpop.xlane.xlu0 %589
        %v591 = vadd.f32 %v568, %v569
        %592 = vadd.xlane.f32.xlu0 %v591
        %v593 = vpop.xlane.xlu0 %592
        %v594 = vmul.f32 %v572, 0.00390625
        %v595 = vmul.f32 %v575, 0.00390625
        %v596 = vmul.f32 %v578, 0.00390625
        %v597 = vmul.f32 %v581, 0.00390625
        %v598 = vmul.f32 %v584, 0.00390625
        %v599 = vmul.f32 %v587, 0.00390625
        %v600 = vmul.f32 %v590, 0.00390625
        %v601 = vmul.f32 %v593, 0.00390625
        %v602 = vld [vmem:[%s396] sm:$0xff]
        %v603 = vld [vmem:[%s396 + $0x8] sm:$0xff]
        %v604 = vld [vmem:[%s396 + $0x10] sm:$0xff]
        %v605 = vld [vmem:[%s396 + $0x18] sm:$0xff]
        %v606 = vld [vmem:[%s396 + $0x20] sm:$0xff]
        %v607 = vld [vmem:[%s396 + $0x28] sm:$0xff]
        %v608 = vld [vmem:[%s396 + $0x30] sm:$0xff]
        %v609 = vld [vmem:[%s396 + $0x38] sm:$0xff]
        %v610 = vld [vmem:[%s396 + $0x40] sm:$0xff]
        %v611 = vld [vmem:[%s396 + $0x48] sm:$0xff]
        %v612 = vld [vmem:[%s396 + $0x50] sm:$0xff]
        %v613 = vld [vmem:[%s396 + $0x58] sm:$0xff]
        %v614 = vld [vmem:[%s396 + $0x60] sm:$0xff]
        %v615 = vld [vmem:[%s396 + $0x68] sm:$0xff]
        %v616 = vld [vmem:[%s396 + $0x70] sm:$0xff]
        %v617 = vld [vmem:[%s396 + $0x78] sm:$0xff]
        %v618 = vadd.f32 %v602, %v603
        %619 = vadd.xlane.f32.xlu0 %v618
        %v620 = vpop.xlane.xlu0 %619
        %v621 = vadd.f32 %v604, %v605
        %622 = vadd.xlane.f32.xlu0 %v621
        %v623 = vpop.xlane.xlu0 %622
        %v624 = vadd.f32 %v606, %v607
        %625 = vadd.xlane.f32.xlu0 %v624
        %v626 = vpop.xlane.xlu0 %625
        %v627 = vadd.f32 %v608, %v609
        %628 = vadd.xlane.f32.xlu0 %v627
        %v629 = vpop.xlane.xlu0 %628
        %v630 = vadd.f32 %v610, %v611
        %631 = vadd.xlane.f32.xlu0 %v630
        %v632 = vpop.xlane.xlu0 %631
        %v633 = vadd.f32 %v612, %v613
        %634 = vadd.xlane.f32.xlu0 %v633
        %v635 = vpop.xlane.xlu0 %634
        %v636 = vadd.f32 %v614, %v615
        %637 = vadd.xlane.f32.xlu0 %v636
        %v638 = vpop.xlane.xlu0 %637
        %v639 = vadd.f32 %v616, %v617
        %640 = vadd.xlane.f32.xlu0 %v639
        %v641 = vpop.xlane.xlu0 %640
        %v642 = vmul.f32 %v620, 0.00390625
        %v643 = vmul.f32 %v623, 0.00390625
        %v644 = vmul.f32 %v626, 0.00390625
        %v645 = vmul.f32 %v629, 0.00390625
        %v646 = vmul.f32 %v632, 0.00390625
        %v647 = vmul.f32 %v635, 0.00390625
        %v648 = vmul.f32 %v638, 0.00390625
        %v649 = vmul.f32 %v641, 0.00390625
        %v650 = vld [vmem:[%s0] sm:$0xff]
        %v651 = vld [vmem:[%s0 + $0x8] sm:$0xff]
        %v652 = vld [vmem:[%s0 + $0x10] sm:$0xff]
        %v653 = vld [vmem:[%s0 + $0x18] sm:$0xff]
        %v654 = vld [vmem:[%s0 + $0x20] sm:$0xff]
        %v655 = vld [vmem:[%s0 + $0x28] sm:$0xff]
        %v656 = vld [vmem:[%s0 + $0x30] sm:$0xff]
        %v657 = vld [vmem:[%s0 + $0x38] sm:$0xff]
        %s658 = scalar_lea.vmem %s0, 64
        %v659 = vld [vmem:[%s658] sm:$0xff]
        %v660 = vld [vmem:[%s658 + $0x8] sm:$0xff]
        %v661 = vld [vmem:[%s658 + $0x10] sm:$0xff]
        %v662 = vld [vmem:[%s658 + $0x18] sm:$0xff]
        %v663 = vld [vmem:[%s658 + $0x20] sm:$0xff]
        %v664 = vld [vmem:[%s658 + $0x28] sm:$0xff]
        %v665 = vld [vmem:[%s658 + $0x30] sm:$0xff]
        %v666 = vld [vmem:[%s658 + $0x38] sm:$0xff]
        %s667 = scalar_lea.vmem %s0, 128
        %v668 = vld [vmem:[%s667] sm:$0xff]
        %v669 = vld [vmem:[%s667 + $0x8] sm:$0xff]
        %v670 = vld [vmem:[%s667 + $0x10] sm:$0xff]
        %v671 = vld [vmem:[%s667 + $0x18] sm:$0xff]
        %v672 = vld [vmem:[%s667 + $0x20] sm:$0xff]
        %v673 = vld [vmem:[%s667 + $0x28] sm:$0xff]
        %v674 = vld [vmem:[%s667 + $0x30] sm:$0xff]
        %v675 = vld [vmem:[%s667 + $0x38] sm:$0xff]
        %s676 = scalar_lea.vmem %s0, 192
        %v677 = vld [vmem:[%s676] sm:$0xff]
        %v678 = vld [vmem:[%s676 + $0x8] sm:$0xff]
        %v679 = vld [vmem:[%s676 + $0x10] sm:$0xff]
        %v680 = vld [vmem:[%s676 + $0x18] sm:$0xff]
        %v681 = vld [vmem:[%s676 + $0x20] sm:$0xff]
        %v682 = vld [vmem:[%s676 + $0x28] sm:$0xff]
        %v683 = vld [vmem:[%s676 + $0x30] sm:$0xff]
        %v684 = vld [vmem:[%s676 + $0x38] sm:$0xff]
        %v685 = vld [vmem:[%s1] sm:$0x1]
        %s686 = scalar_lea.vmem %s1, 1
        %v687 = vld [vmem:[%s686] sm:$0x1]
        %s688 = scalar_lea.vmem %s1, 2
        %v689 = vld [vmem:[%s688] sm:$0x1]
        %s690 = scalar_lea.vmem %s1, 3
        %v691 = vld [vmem:[%s690] sm:$0x1]
        %v692 = vld [vmem:[%s2] sm:$0xff]
        %v693 = vld [vmem:[%s2 + $0x8] sm:$0xff]
        %v694 = vld [vmem:[%s2 + $0x10] sm:$0xff]
        %v695 = vld [vmem:[%s2 + $0x18] sm:$0xff]
        %v696 = vld [vmem:[%s2 + $0x20] sm:$0xff]
        %v697 = vld [vmem:[%s2 + $0x28] sm:$0xff]
        %v698 = vld [vmem:[%s2 + $0x30] sm:$0xff]
        %v699 = vld [vmem:[%s2 + $0x38] sm:$0xff]
        %s700 = scalar_lea.vmem %s2, 64
        %v701 = vld [vmem:[%s700] sm:$0xff]
        %v702 = vld [vmem:[%s700 + $0x8] sm:$0xff]
        %v703 = vld [vmem:[%s700 + $0x10] sm:$0xff]
        %v704 = vld [vmem:[%s700 + $0x18] sm:$0xff]
        %v705 = vld [vmem:[%s700 + $0x20] sm:$0xff]
        %v706 = vld [vmem:[%s700 + $0x28] sm:$0xff]
        %v707 = vld [vmem:[%s700 + $0x30] sm:$0xff]
        %v708 = vld [vmem:[%s700 + $0x38] sm:$0xff]
        %s709 = scalar_lea.vmem %s2, 128
        %v710 = vld [vmem:[%s709] sm:$0xff]
        %v711 = vld [vmem:[%s709 + $0x8] sm:$0xff]
        %v712 = vld [vmem:[%s709 + $0x10] sm:$0xff]
        %v713 = vld [vmem:[%s709 + $0x18] sm:$0xff]
        %v714 = vld [vmem:[%s709 + $0x20] sm:$0xff]
        %v715 = vld [vmem:[%s709 + $0x28] sm:$0xff]
        %v716 = vld [vmem:[%s709 + $0x30] sm:$0xff]
        %v717 = vld [vmem:[%s709 + $0x38] sm:$0xff]
        %s718 = scalar_lea.vmem %s2, 192
        %v719 = vld [vmem:[%s718] sm:$0xff]
        %v720 = vld [vmem:[%s718 + $0x8] sm:$0xff]
        %v721 = vld [vmem:[%s718 + $0x10] sm:$0xff]
        %v722 = vld [vmem:[%s718 + $0x18] sm:$0xff]
        %v723 = vld [vmem:[%s718 + $0x20] sm:$0xff]
        %v724 = vld [vmem:[%s718 + $0x28] sm:$0xff]
        %v725 = vld [vmem:[%s718 + $0x30] sm:$0xff]
        %v726 = vld [vmem:[%s718 + $0x38] sm:$0xff]
        %v727 = vld [vmem:[%s3] sm:$0xff]
        %v728 = vld [vmem:[%s3 + $0x8] sm:$0xff]
        %v729 = vld [vmem:[%s3 + $0x10] sm:$0xff]
        %v730 = vld [vmem:[%s3 + $0x18] sm:$0xff]
        %v731 = vld [vmem:[%s3 + $0x20] sm:$0xff]
        %v732 = vld [vmem:[%s3 + $0x28] sm:$0xff]
        %v733 = vld [vmem:[%s3 + $0x30] sm:$0xff]
        %v734 = vld [vmem:[%s3 + $0x38] sm:$0xff]
        %s735 = scalar_lea.vmem %s3, 64
        %v736 = vld [vmem:[%s735] sm:$0xff]
        %v737 = vld [vmem:[%s735 + $0x8] sm:$0xff]
        %v738 = vld [vmem:[%s735 + $0x10] sm:$0xff]
        %v739 = vld [vmem:[%s735 + $0x18] sm:$0xff]
        %v740 = vld [vmem:[%s735 + $0x20] sm:$0xff]
        %v741 = vld [vmem:[%s735 + $0x28] sm:$0xff]
        %v742 = vld [vmem:[%s735 + $0x30] sm:$0xff]
        %v743 = vld [vmem:[%s735 + $0x38] sm:$0xff]
        %s744 = scalar_lea.vmem %s3, 128
        %v745 = vld [vmem:[%s744] sm:$0xff]
        %v746 = vld [vmem:[%s744 + $0x8] sm:$0xff]
        %v747 = vld [vmem:[%s744 + $0x10] sm:$0xff]
        %v748 = vld [vmem:[%s744 + $0x18] sm:$0xff]
        %v749 = vld [vmem:[%s744 + $0x20] sm:$0xff]
        %v750 = vld [vmem:[%s744 + $0x28] sm:$0xff]
        %v751 = vld [vmem:[%s744 + $0x30] sm:$0xff]
        %v752 = vld [vmem:[%s744 + $0x38] sm:$0xff]
        %s753 = scalar_lea.vmem %s3, 192
        %v754 = vld [vmem:[%s753] sm:$0xff]
        %v755 = vld [vmem:[%s753 + $0x8] sm:$0xff]
        %v756 = vld [vmem:[%s753 + $0x10] sm:$0xff]
        %v757 = vld [vmem:[%s753 + $0x18] sm:$0xff]
        %v758 = vld [vmem:[%s753 + $0x20] sm:$0xff]
        %v759 = vld [vmem:[%s753 + $0x28] sm:$0xff]
        %v760 = vld [vmem:[%s753 + $0x30] sm:$0xff]
        %v761 = vld [vmem:[%s753 + $0x38] sm:$0xff]
        %v762 = vld [vmem:[%s4] sm:$0xff]
        %v763 = vld [vmem:[%s4 + $0x8] sm:$0xff]
        %v764 = vld [vmem:[%s4 + $0x10] sm:$0xff]
        %v765 = vld [vmem:[%s4 + $0x18] sm:$0xff]
        %v766 = vld [vmem:[%s4 + $0x20] sm:$0xff]
        %v767 = vld [vmem:[%s4 + $0x28] sm:$0xff]
        %v768 = vld [vmem:[%s4 + $0x30] sm:$0xff]
        %v769 = vld [vmem:[%s4 + $0x38] sm:$0xff]
        %s770 = scalar_lea.vmem %s4, 64
        %v771 = vld [vmem:[%s770] sm:$0xff]
        %v772 = vld [vmem:[%s770 + $0x8] sm:$0xff]
        %v773 = vld [vmem:[%s770 + $0x10] sm:$0xff]
        %v774 = vld [vmem:[%s770 + $0x18] sm:$0xff]
        %v775 = vld [vmem:[%s770 + $0x20] sm:$0xff]
        %v776 = vld [vmem:[%s770 + $0x28] sm:$0xff]
        %v777 = vld [vmem:[%s770 + $0x30] sm:$0xff]
        %v778 = vld [vmem:[%s770 + $0x38] sm:$0xff]
        %s779 = scalar_lea.vmem %s4, 128
        %v780 = vld [vmem:[%s779] sm:$0xff]
        %v781 = vld [vmem:[%s779 + $0x8] sm:$0xff]
        %v782 = vld [vmem:[%s779 + $0x10] sm:$0xff]
        %v783 = vld [vmem:[%s779 + $0x18] sm:$0xff]
        %v784 = vld [vmem:[%s779 + $0x20] sm:$0xff]
        %v785 = vld [vmem:[%s779 + $0x28] sm:$0xff]
        %v786 = vld [vmem:[%s779 + $0x30] sm:$0xff]
        %v787 = vld [vmem:[%s779 + $0x38] sm:$0xff]
        %s788 = scalar_lea.vmem %s4, 192
        %v789 = vld [vmem:[%s788] sm:$0xff]
        %v790 = vld [vmem:[%s788 + $0x8] sm:$0xff]
        %v791 = vld [vmem:[%s788 + $0x10] sm:$0xff]
        %v792 = vld [vmem:[%s788 + $0x18] sm:$0xff]
        %v793 = vld [vmem:[%s788 + $0x20] sm:$0xff]
        %v794 = vld [vmem:[%s788 + $0x28] sm:$0xff]
        %v795 = vld [vmem:[%s788 + $0x30] sm:$0xff]
        %v796 = vld [vmem:[%s788 + $0x38] sm:$0xff]
        %v797 = vld [vmem:[%s5] sm:$0x1]
        %v798 = vmul.f32 %v650, %v498
        %v799 = vmul.f32 %v651, %v499
        %v800 = vmul.f32 %v652, %v500
        %v801 = vmul.f32 %v653, %v501
        %v802 = vmul.f32 %v654, %v502
        %v803 = vmul.f32 %v655, %v503
        %v804 = vmul.f32 %v656, %v504
        %v805 = vmul.f32 %v657, %v505
        %vm806 = vcmask 31744
        %v807 = vsel %vm806, %v798, 0.0
        %v808 = vsel %vm806, %v799, 0.0
        %v809 = vadd.f32 %v807, %v808
        %v810 = vsel %vm806, %v800, 0.0
        %v811 = vadd.f32 %v809, %v810
        %v812 = vsel %vm806, %v801, 0.0
        %v813 = vadd.f32 %v811, %v812
        %v814 = vsel %vm806, %v802, 0.0
        %v815 = vadd.f32 %v813, %v814
        %v816 = vsel %vm806, %v803, 0.0
        %v817 = vadd.f32 %v815, %v816
        %v818 = vsel %vm806, %v804, 0.0
        %v819 = vadd.f32 %v817, %v818
        %v820 = vsel %vm806, %v805, 0.0
        %v821 = vadd.f32 %v819, %v820
        %v822 = vrot.slane %v821, 4
        %v823 = vadd.f32 %v821, %v822
        %v824 = vrot.slane %v823, 2
        %v825 = vadd.f32 %v823, %v824
        %v826 = vrot.slane %v825, 1
        %v827 = vadd.f32 %v825, %v826
        %v828 = vadd.f32 %v827, %v685
        %v829 = vmax.f32 %v828, 0.0
        %v830 = vlaneseq
        %v831 = vshrl.u32 %v830, 7
        %v832 = vsub.s32 0, %v831
        %v833 = vrot.slane %v829, %v832
        %v834 = vmul.f32 %v692, %v833
        %v835 = vmul.f32 %v693, %v833
        %v836 = vmul.f32 %v694, %v833
        %v837 = vmul.f32 %v695, %v833
        %v838 = vmul.f32 %v696, %v833
        %v839 = vmul.f32 %v697, %v833
        %v840 = vmul.f32 %v698, %v833
        %v841 = vmul.f32 %v699, %v833
        %v842 = vsel %vm806, %v834, 0.0
        %843 = vadd.xlane.f32.xlu0 %v842
        %v844 = vpop.xlane.xlu0 %843
        %v845 = vsel %vm806, %v835, 0.0
        %846 = vadd.xlane.f32.xlu0 %v845
        %v847 = vpop.xlane.xlu0 %846
        %v848 = vsel %vm806, %v836, 0.0
        %849 = vadd.xlane.f32.xlu0 %v848
        %v850 = vpop.xlane.xlu0 %849
        %v851 = vsel %vm806, %v837, 0.0
        %852 = vadd.xlane.f32.xlu0 %v851
        %v853 = vpop.xlane.xlu0 %852
        %v854 = vsel %vm806, %v838, 0.0
        %855 = vadd.xlane.f32.xlu0 %v854
        %v856 = vpop.xlane.xlu0 %855
        %v857 = vsel %vm806, %v839, 0.0
        %858 = vadd.xlane.f32.xlu0 %v857
        %v859 = vpop.xlane.xlu0 %858
        %v860 = vsel %vm806, %v840, 0.0
        %861 = vadd.xlane.f32.xlu0 %v860
        %v862 = vpop.xlane.xlu0 %861
        %v863 = vsel %vm806, %v841, 0.0
        %864 = vadd.xlane.f32.xlu0 %v863
        %v865 = vpop.xlane.xlu0 %864
        %v866 = vadd.f32 %v844, %v727
        %v867 = vadd.f32 %v847, %v728
        %v868 = vadd.f32 %v850, %v729
        %v869 = vadd.f32 %v853, %v730
        %v870 = vadd.f32 %v856, %v731
        %v871 = vadd.f32 %v859, %v732
        %v872 = vadd.f32 %v862, %v733
        %v873 = vadd.f32 %v865, %v734
        %v874 = vsub.f32 0.0, %v866
        %v875 = vsub.f32 0.0, %v867
        %v876 = vsub.f32 0.0, %v868
        %v877 = vsub.f32 0.0, %v869
        %v878 = vsub.f32 0.0, %v870
        %v879 = vsub.f32 0.0, %v871
        %v880 = vsub.f32 0.0, %v872
        %v881 = vsub.f32 0.0, %v873
        %v882 = vmul.f32 %v874, 1.442695
        %v883 = vpow.pop %v882
        %v884 = vmul.f32 %v875, 1.442695
        %v885 = vpow.pop %v884
        %v886 = vmul.f32 %v876, 1.442695
        %v887 = vpow.pop %v886
        %v888 = vmul.f32 %v877, 1.442695
        %v889 = vpow.pop %v888
        %v890 = vmul.f32 %v878, 1.442695
        %v891 = vpow.pop %v890
        %v892 = vmul.f32 %v879, 1.442695
        %v893 = vpow.pop %v892
        %v894 = vmul.f32 %v880, 1.442695
        %v895 = vpow.pop %v894
        %v896 = vmul.f32 %v881, 1.442695
        %v897 = vpow.pop %v896
        %v898 = vadd.f32 %v883, 1.0
        %v899 = vadd.f32 %v885, 1.0
        %v900 = vadd.f32 %v887, 1.0
        %v901 = vadd.f32 %v889, 1.0
        %v902 = vadd.f32 %v891, 1.0
        %v903 = vadd.f32 %v893, 1.0
        %v904 = vadd.f32 %v895, 1.0
        %v905 = vadd.f32 %v897, 1.0
        %v906 = vrcp.pop %v898
        %v907 = vmul.f32 1.0, %v906
        %v908 = vrcp.pop %v899
        %v909 = vmul.f32 1.0, %v908
        %v910 = vrcp.pop %v900
        %v911 = vmul.f32 1.0, %v910
        %v912 = vrcp.pop %v901
        %v913 = vmul.f32 1.0, %v912
        %v914 = vrcp.pop %v902
        %v915 = vmul.f32 1.0, %v914
        %v916 = vrcp.pop %v903
        %v917 = vmul.f32 1.0, %v916
        %v918 = vrcp.pop %v904
        %v919 = vmul.f32 1.0, %v918
        %v920 = vrcp.pop %v905
        %v921 = vmul.f32 1.0, %v920
        %v922 = vmul.f32 %v498, %v907
        %v923 = vmul.f32 %v499, %v909
        %v924 = vmul.f32 %v500, %v911
        %v925 = vmul.f32 %v501, %v913
        %v926 = vmul.f32 %v502, %v915
        %v927 = vmul.f32 %v503, %v917
        %v928 = vmul.f32 %v504, %v919
        %v929 = vmul.f32 %v505, %v921
        %v930 = vmul.f32 %v659, %v546
        %v931 = vmul.f32 %v660, %v547
        %v932 = vmul.f32 %v661, %v548
        %v933 = vmul.f32 %v662, %v549
        %v934 = vmul.f32 %v663, %v550
        %v935 = vmul.f32 %v664, %v551
        %v936 = vmul.f32 %v665, %v552
        %v937 = vmul.f32 %v666, %v553
        %v938 = vsel %vm806, %v930, 0.0
        %v939 = vsel %vm806, %v931, 0.0
        %v940 = vadd.f32 %v938, %v939
        %v941 = vsel %vm806, %v932, 0.0
        %v942 = vadd.f32 %v940, %v941
        %v943 = vsel %vm806, %v933, 0.0
        %v944 = vadd.f32 %v942, %v943
        %v945 = vsel %vm806, %v934, 0.0
        %v946 = vadd.f32 %v944, %v945
        %v947 = vsel %vm806, %v935, 0.0
        %v948 = vadd.f32 %v946, %v947
        %v949 = vsel %vm806, %v936, 0.0
        %v950 = vadd.f32 %v948, %v949
        %v951 = vsel %vm806, %v937, 0.0
        %v952 = vadd.f32 %v950, %v951
        %v953 = vrot.slane %v952, 4
        %v954 = vadd.f32 %v952, %v953
        %v955 = vrot.slane %v954, 2
        %v956 = vadd.f32 %v954, %v955
        %v957 = vrot.slane %v956, 1
        %v958 = vadd.f32 %v956, %v957
        %v959 = vadd.f32 %v958, %v687
        %v960 = vmax.f32 %v959, 0.0
        %v961 = vlaneseq
        %v962 = vshrl.u32 %v961, 7
        %v963 = vsub.s32 0, %v962
        %v964 = vrot.slane %v960, %v963
        %v965 = vmul.f32 %v701, %v964
        %v966 = vmul.f32 %v702, %v964
        %v967 = vmul.f32 %v703, %v964
        %v968 = vmul.f32 %v704, %v964
        %v969 = vmul.f32 %v705, %v964
        %v970 = vmul.f32 %v706, %v964
        %v971 = vmul.f32 %v707, %v964
        %v972 = vmul.f32 %v708, %v964
        %v973 = vsel %vm806, %v965, 0.0
        %974 = vadd.xlane.f32.xlu0 %v973
        %v975 = vpop.xlane.xlu0 %974
        %v976 = vsel %vm806, %v966, 0.0
        %977 = vadd.xlane.f32.xlu0 %v976
        %v978 = vpop.xlane.xlu0 %977
        %v979 = vsel %vm806, %v967, 0.0
        %980 = vadd.xlane.f32.xlu0 %v979
        %v981 = vpop.xlane.xlu0 %980
        %v982 = vsel %vm806, %v968, 0.0
        %983 = vadd.xlane.f32.xlu0 %v982
        %v984 = vpop.xlane.xlu0 %983
        %v985 = vsel %vm806, %v969, 0.0
        %986 = vadd.xlane.f32.xlu0 %v985
        %v987 = vpop.xlane.xlu0 %986
        %v988 = vsel %vm806, %v970, 0.0
        %989 = vadd.xlane.f32.xlu0 %v988
        %v990 = vpop.xlane.xlu0 %989
        %v991 = vsel %vm806, %v971, 0.0
        %992 = vadd.xlane.f32.xlu0 %v991
        %v993 = vpop.xlane.xlu0 %992
        %v994 = vsel %vm806, %v972, 0.0
        %995 = vadd.xlane.f32.xlu0 %v994
        %v996 = vpop.xlane.xlu0 %995
        %v997 = vadd.f32 %v975, %v736
        %v998 = vadd.f32 %v978, %v737
        %v999 = vadd.f32 %v981, %v738
        %v1000 = vadd.f32 %v984, %v739
        %v1001 = vadd.f32 %v987, %v740
        %v1002 = vadd.f32 %v990, %v741
        %v1003 = vadd.f32 %v993, %v742
        %v1004 = vadd.f32 %v996, %v743
        %v1005 = vsub.f32 0.0, %v997
        %v1006 = vsub.f32 0.0, %v998
        %v1007 = vsub.f32 0.0, %v999
        %v1008 = vsub.f32 0.0, %v1000
        %v1009 = vsub.f32 0.0, %v1001
        %v1010 = vsub.f32 0.0, %v1002
        %v1011 = vsub.f32 0.0, %v1003
        %v1012 = vsub.f32 0.0, %v1004
        %v1013 = vmul.f32 %v1005, 1.442695
        %v1014 = vpow.pop %v1013
        %v1015 = vmul.f32 %v1006, 1.442695
        %v1016 = vpow.pop %v1015
        %v1017 = vmul.f32 %v1007, 1.442695
        %v1018 = vpow.pop %v1017
        %v1019 = vmul.f32 %v1008, 1.442695
        %v1020 = vpow.pop %v1019
        %v1021 = vmul.f32 %v1009, 1.442695
        %v1022 = vpow.pop %v1021
        %v1023 = vmul.f32 %v1010, 1.442695
        %v1024 = vpow.pop %v1023
        %v1025 = vmul.f32 %v1011, 1.442695
        %v1026 = vpow.pop %v1025
        %v1027 = vmul.f32 %v1012, 1.442695
        %v1028 = vpow.pop %v1027
        %v1029 = vadd.f32 %v1014, 1.0
        %v1030 = vadd.f32 %v1016, 1.0
        %v1031 = vadd.f32 %v1018, 1.0
        %v1032 = vadd.f32 %v1020, 1.0
        %v1033 = vadd.f32 %v1022, 1.0
        %v1034 = vadd.f32 %v1024, 1.0
        %v1035 = vadd.f32 %v1026, 1.0
        %v1036 = vadd.f32 %v1028, 1.0
        %v1037 = vrcp.pop %v1029
        %v1038 = vmul.f32 1.0, %v1037
        %v1039 = vrcp.pop %v1030
        %v1040 = vmul.f32 1.0, %v1039
        %v1041 = vrcp.pop %v1031
        %v1042 = vmul.f32 1.0, %v1041
        %v1043 = vrcp.pop %v1032
        %v1044 = vmul.f32 1.0, %v1043
        %v1045 = vrcp.pop %v1033
        %v1046 = vmul.f32 1.0, %v1045
        %v1047 = vrcp.pop %v1034
        %v1048 = vmul.f32 1.0, %v1047
        %v1049 = vrcp.pop %v1035
        %v1050 = vmul.f32 1.0, %v1049
        %v1051 = vrcp.pop %v1036
        %v1052 = vmul.f32 1.0, %v1051
        %v1053 = vmul.f32 %v546, %v1038
        %v1054 = vmul.f32 %v547, %v1040
        %v1055 = vmul.f32 %v548, %v1042
        %v1056 = vmul.f32 %v549, %v1044
        %v1057 = vmul.f32 %v550, %v1046
        %v1058 = vmul.f32 %v551, %v1048
        %v1059 = vmul.f32 %v552, %v1050
        %v1060 = vmul.f32 %v553, %v1052
        %v1061 = vmul.f32 %v668, %v594
        %v1062 = vmul.f32 %v669, %v595
        %v1063 = vmul.f32 %v670, %v596
        %v1064 = vmul.f32 %v671, %v597
        %v1065 = vmul.f32 %v672, %v598
        %v1066 = vmul.f32 %v673, %v599
        %v1067 = vmul.f32 %v674, %v600
        %v1068 = vmul.f32 %v675, %v601
        %v1069 = vsel %vm806, %v1061, 0.0
        %v1070 = vsel %vm806, %v1062, 0.0
        %v1071 = vadd.f32 %v1069, %v1070
        %v1072 = vsel %vm806, %v1063, 0.0
        %v1073 = vadd.f32 %v1071, %v1072
        %v1074 = vsel %vm806, %v1064, 0.0
        %v1075 = vadd.f32 %v1073, %v1074
        %v1076 = vsel %vm806, %v1065, 0.0
        %v1077 = vadd.f32 %v1075, %v1076
        %v1078 = vsel %vm806, %v1066, 0.0
        %v1079 = vadd.f32 %v1077, %v1078
        %v1080 = vsel %vm806, %v1067, 0.0
        %v1081 = vadd.f32 %v1079, %v1080
        %v1082 = vsel %vm806, %v1068, 0.0
        %v1083 = vadd.f32 %v1081, %v1082
        %v1084 = vrot.slane %v1083, 4
        %v1085 = vadd.f32 %v1083, %v1084
        %v1086 = vrot.slane %v1085, 2
        %v1087 = vadd.f32 %v1085, %v1086
        %v1088 = vrot.slane %v1087, 1
        %v1089 = vadd.f32 %v1087, %v1088
        %v1090 = vadd.f32 %v1089, %v689
        %v1091 = vmax.f32 %v1090, 0.0
        %v1092 = vlaneseq
        %v1093 = vshrl.u32 %v1092, 7
        %v1094 = vsub.s32 0, %v1093
        %v1095 = vrot.slane %v1091, %v1094
        %v1096 = vmul.f32 %v710, %v1095
        %v1097 = vmul.f32 %v711, %v1095
        %v1098 = vmul.f32 %v712, %v1095
        %v1099 = vmul.f32 %v713, %v1095
        %v1100 = vmul.f32 %v714, %v1095
        %v1101 = vmul.f32 %v715, %v1095
        %v1102 = vmul.f32 %v716, %v1095
        %v1103 = vmul.f32 %v717, %v1095
        %v1104 = vsel %vm806, %v1096, 0.0
        %1105 = vadd.xlane.f32.xlu0 %v1104
        %v1106 = vpop.xlane.xlu0 %1105
        %v1107 = vsel %vm806, %v1097, 0.0
        %1108 = vadd.xlane.f32.xlu0 %v1107
        %v1109 = vpop.xlane.xlu0 %1108
        %v1110 = vsel %vm806, %v1098, 0.0
        %1111 = vadd.xlane.f32.xlu0 %v1110
        %v1112 = vpop.xlane.xlu0 %1111
        %v1113 = vsel %vm806, %v1099, 0.0
        %1114 = vadd.xlane.f32.xlu0 %v1113
        %v1115 = vpop.xlane.xlu0 %1114
        %v1116 = vsel %vm806, %v1100, 0.0
        %1117 = vadd.xlane.f32.xlu0 %v1116
        %v1118 = vpop.xlane.xlu0 %1117
        %v1119 = vsel %vm806, %v1101, 0.0
        %1120 = vadd.xlane.f32.xlu0 %v1119
        %v1121 = vpop.xlane.xlu0 %1120
        %v1122 = vsel %vm806, %v1102, 0.0
        %1123 = vadd.xlane.f32.xlu0 %v1122
        %v1124 = vpop.xlane.xlu0 %1123
        %v1125 = vsel %vm806, %v1103, 0.0
        %1126 = vadd.xlane.f32.xlu0 %v1125
        %v1127 = vpop.xlane.xlu0 %1126
        %v1128 = vadd.f32 %v1106, %v745
        %v1129 = vadd.f32 %v1109, %v746
        %v1130 = vadd.f32 %v1112, %v747
        %v1131 = vadd.f32 %v1115, %v748
        %v1132 = vadd.f32 %v1118, %v749
        %v1133 = vadd.f32 %v1121, %v750
        %v1134 = vadd.f32 %v1124, %v751
        %v1135 = vadd.f32 %v1127, %v752
        %v1136 = vsub.f32 0.0, %v1128
        %v1137 = vsub.f32 0.0, %v1129
        %v1138 = vsub.f32 0.0, %v1130
        %v1139 = vsub.f32 0.0, %v1131
        %v1140 = vsub.f32 0.0, %v1132
        %v1141 = vsub.f32 0.0, %v1133
        %v1142 = vsub.f32 0.0, %v1134
        %v1143 = vsub.f32 0.0, %v1135
        %v1144 = vmul.f32 %v1136, 1.442695
        %v1145 = vpow.pop %v1144
        %v1146 = vmul.f32 %v1137, 1.442695
        %v1147 = vpow.pop %v1146
        %v1148 = vmul.f32 %v1138, 1.442695
        %v1149 = vpow.pop %v1148
        %v1150 = vmul.f32 %v1139, 1.442695
        %v1151 = vpow.pop %v1150
        %v1152 = vmul.f32 %v1140, 1.442695
        %v1153 = vpow.pop %v1152
        %v1154 = vmul.f32 %v1141, 1.442695
        %v1155 = vpow.pop %v1154
        %v1156 = vmul.f32 %v1142, 1.442695
        %v1157 = vpow.pop %v1156
        %v1158 = vmul.f32 %v1143, 1.442695
        %v1159 = vpow.pop %v1158
        %v1160 = vadd.f32 %v1145, 1.0
        %v1161 = vadd.f32 %v1147, 1.0
        %v1162 = vadd.f32 %v1149, 1.0
        %v1163 = vadd.f32 %v1151, 1.0
        %v1164 = vadd.f32 %v1153, 1.0
        %v1165 = vadd.f32 %v1155, 1.0
        %v1166 = vadd.f32 %v1157, 1.0
        %v1167 = vadd.f32 %v1159, 1.0
        %v1168 = vrcp.pop %v1160
        %v1169 = vmul.f32 1.0, %v1168
        %v1170 = vrcp.pop %v1161
        %v1171 = vmul.f32 1.0, %v1170
        %v1172 = vrcp.pop %v1162
        %v1173 = vmul.f32 1.0, %v1172
        %v1174 = vrcp.pop %v1163
        %v1175 = vmul.f32 1.0, %v1174
        %v1176 = vrcp.pop %v1164
        %v1177 = vmul.f32 1.0, %v1176
        %v1178 = vrcp.pop %v1165
        %v1179 = vmul.f32 1.0, %v1178
        %v1180 = vrcp.pop %v1166
        %v1181 = vmul.f32 1.0, %v1180
        %v1182 = vrcp.pop %v1167
        %v1183 = vmul.f32 1.0, %v1182
        %v1184 = vmul.f32 %v594, %v1169
        %v1185 = vmul.f32 %v595, %v1171
        %v1186 = vmul.f32 %v596, %v1173
        %v1187 = vmul.f32 %v597, %v1175
        %v1188 = vmul.f32 %v598, %v1177
        %v1189 = vmul.f32 %v599, %v1179
        %v1190 = vmul.f32 %v600, %v1181
        %v1191 = vmul.f32 %v601, %v1183
        %v1192 = vmul.f32 %v677, %v642
        %v1193 = vmul.f32 %v678, %v643
        %v1194 = vmul.f32 %v679, %v644
        %v1195 = vmul.f32 %v680, %v645
        %v1196 = vmul.f32 %v681, %v646
        %v1197 = vmul.f32 %v682, %v647
        %v1198 = vmul.f32 %v683, %v648
        %v1199 = vmul.f32 %v684, %v649
        %v1200 = vsel %vm806, %v1192, 0.0
        %v1201 = vsel %vm806, %v1193, 0.0
        %v1202 = vadd.f32 %v1200, %v1201
        %v1203 = vsel %vm806, %v1194, 0.0
        %v1204 = vadd.f32 %v1202, %v1203
        %v1205 = vsel %vm806, %v1195, 0.0
        %v1206 = vadd.f32 %v1204, %v1205
        %v1207 = vsel %vm806, %v1196, 0.0
        %v1208 = vadd.f32 %v1206, %v1207
        %v1209 = vsel %vm806, %v1197, 0.0
        %v1210 = vadd.f32 %v1208, %v1209
        %v1211 = vsel %vm806, %v1198, 0.0
        %v1212 = vadd.f32 %v1210, %v1211
        %v1213 = vsel %vm806, %v1199, 0.0
        %v1214 = vadd.f32 %v1212, %v1213
        %v1215 = vrot.slane %v1214, 4
        %v1216 = vadd.f32 %v1214, %v1215
        %v1217 = vrot.slane %v1216, 2
        %v1218 = vadd.f32 %v1216, %v1217
        %v1219 = vrot.slane %v1218, 1
        %v1220 = vadd.f32 %v1218, %v1219
        %v1221 = vadd.f32 %v1220, %v691
        %v1222 = vmax.f32 %v1221, 0.0
        %v1223 = vlaneseq
        %v1224 = vshrl.u32 %v1223, 7
        %v1225 = vsub.s32 0, %v1224
        %v1226 = vrot.slane %v1222, %v1225
        %v1227 = vmul.f32 %v719, %v1226
        %v1228 = vmul.f32 %v720, %v1226
        %v1229 = vmul.f32 %v721, %v1226
        %v1230 = vmul.f32 %v722, %v1226
        %v1231 = vmul.f32 %v723, %v1226
        %v1232 = vmul.f32 %v724, %v1226
        %v1233 = vmul.f32 %v725, %v1226
        %v1234 = vmul.f32 %v726, %v1226
        %v1235 = vsel %vm806, %v1227, 0.0
        %1236 = vadd.xlane.f32.xlu0 %v1235
        %v1237 = vpop.xlane.xlu0 %1236
        %v1238 = vsel %vm806, %v1228, 0.0
        %1239 = vadd.xlane.f32.xlu0 %v1238
        %v1240 = vpop.xlane.xlu0 %1239
        %v1241 = vsel %vm806, %v1229, 0.0
        %1242 = vadd.xlane.f32.xlu0 %v1241
        %v1243 = vpop.xlane.xlu0 %1242
        %v1244 = vsel %vm806, %v1230, 0.0
        %1245 = vadd.xlane.f32.xlu0 %v1244
        %v1246 = vpop.xlane.xlu0 %1245
        %v1247 = vsel %vm806, %v1231, 0.0
        %1248 = vadd.xlane.f32.xlu0 %v1247
        %v1249 = vpop.xlane.xlu0 %1248
        %v1250 = vsel %vm806, %v1232, 0.0
        %1251 = vadd.xlane.f32.xlu0 %v1250
        %v1252 = vpop.xlane.xlu0 %1251
        %v1253 = vsel %vm806, %v1233, 0.0
        %1254 = vadd.xlane.f32.xlu0 %v1253
        %v1255 = vpop.xlane.xlu0 %1254
        %v1256 = vsel %vm806, %v1234, 0.0
        %1257 = vadd.xlane.f32.xlu0 %v1256
        %v1258 = vpop.xlane.xlu0 %1257
        %v1259 = vadd.f32 %v1237, %v754
        %v1260 = vadd.f32 %v1240, %v755
        %v1261 = vadd.f32 %v1243, %v756
        %v1262 = vadd.f32 %v1246, %v757
        %v1263 = vadd.f32 %v1249, %v758
        %v1264 = vadd.f32 %v1252, %v759
        %v1265 = vadd.f32 %v1255, %v760
        %v1266 = vadd.f32 %v1258, %v761
        %v1267 = vsub.f32 0.0, %v1259
        %v1268 = vsub.f32 0.0, %v1260
        %v1269 = vsub.f32 0.0, %v1261
        %v1270 = vsub.f32 0.0, %v1262
        %v1271 = vsub.f32 0.0, %v1263
        %v1272 = vsub.f32 0.0, %v1264
        %v1273 = vsub.f32 0.0, %v1265
        %v1274 = vsub.f32 0.0, %v1266
        %v1275 = vmul.f32 %v1267, 1.442695
        %v1276 = vpow.pop %v1275
        %v1277 = vmul.f32 %v1268, 1.442695
        %v1278 = vpow.pop %v1277
        %v1279 = vmul.f32 %v1269, 1.442695
        %v1280 = vpow.pop %v1279
        %v1281 = vmul.f32 %v1270, 1.442695
        %v1282 = vpow.pop %v1281
        %v1283 = vmul.f32 %v1271, 1.442695
        %v1284 = vpow.pop %v1283
        %v1285 = vmul.f32 %v1272, 1.442695
        %v1286 = vpow.pop %v1285
        %v1287 = vmul.f32 %v1273, 1.442695
        %v1288 = vpow.pop %v1287
        %v1289 = vmul.f32 %v1274, 1.442695
        %v1290 = vpow.pop %v1289
        %v1291 = vadd.f32 %v1276, 1.0
        %v1292 = vadd.f32 %v1278, 1.0
        %v1293 = vadd.f32 %v1280, 1.0
        %v1294 = vadd.f32 %v1282, 1.0
        %v1295 = vadd.f32 %v1284, 1.0
        %v1296 = vadd.f32 %v1286, 1.0
        %v1297 = vadd.f32 %v1288, 1.0
        %v1298 = vadd.f32 %v1290, 1.0
        %v1299 = vrcp.pop %v1291
        %v1300 = vmul.f32 1.0, %v1299
        %v1301 = vrcp.pop %v1292
        %v1302 = vmul.f32 1.0, %v1301
        %v1303 = vrcp.pop %v1293
        %v1304 = vmul.f32 1.0, %v1303
        %v1305 = vrcp.pop %v1294
        %v1306 = vmul.f32 1.0, %v1305
        %v1307 = vrcp.pop %v1295
        %v1308 = vmul.f32 1.0, %v1307
        %v1309 = vrcp.pop %v1296
        %v1310 = vmul.f32 1.0, %v1309
        %v1311 = vrcp.pop %v1297
        %v1312 = vmul.f32 1.0, %v1311
        %v1313 = vrcp.pop %v1298
        %v1314 = vmul.f32 1.0, %v1313
        %v1315 = vmul.f32 %v642, %v1300
        %v1316 = vmul.f32 %v643, %v1302
        %v1317 = vmul.f32 %v644, %v1304
        %v1318 = vmul.f32 %v645, %v1306
        %v1319 = vmul.f32 %v646, %v1308
        %v1320 = vmul.f32 %v647, %v1310
        %v1321 = vmul.f32 %v648, %v1312
        %v1322 = vmul.f32 %v649, %v1314
        %1324 = vset.pattern.permute.xlu0 0
        %1325 = vperm.xlu0 %1324, %v922
        %v1326 = vpop.permute.xlu0 %1325
        %1329 = vset.pattern.permute.xlu0 0
        %1330 = vperm.xlu0 %1329, %v923
        %v1331 = vpop.permute.xlu0 %1330
        %1334 = vset.pattern.permute.xlu0 0
        %1335 = vperm.xlu0 %1334, %v924
        %v1336 = vpop.permute.xlu0 %1335
        %1339 = vset.pattern.permute.xlu0 0
        %1340 = vperm.xlu0 %1339, %v925
        %v1341 = vpop.permute.xlu0 %1340
        %1344 = vset.pattern.permute.xlu0 0
        %1345 = vperm.xlu0 %1344, %v926
        %v1346 = vpop.permute.xlu0 %1345
        %1349 = vset.pattern.permute.xlu0 0
        %1350 = vperm.xlu0 %1349, %v927
        %v1351 = vpop.permute.xlu0 %1350
        %1354 = vset.pattern.permute.xlu0 0
        %1355 = vperm.xlu0 %1354, %v928
        %v1356 = vpop.permute.xlu0 %1355
        %1359 = vset.pattern.permute.xlu0 0
        %1360 = vperm.xlu0 %1359, %v929
        %v1361 = vpop.permute.xlu0 %1360
        %v1363 = vmul.f32 %v762, %v1326
        %v1364 = vmul.f32 %v763, %v1331
        %v1365 = vmul.f32 %v764, %v1336
        %v1366 = vmul.f32 %v765, %v1341
        %v1367 = vmul.f32 %v766, %v1346
        %v1368 = vmul.f32 %v767, %v1351
        %v1369 = vmul.f32 %v768, %v1356
        %v1370 = vmul.f32 %v769, %v1361
        %vm1371 = vcmask 523264
        %v1372 = vsel %vm1371, %v1363, 0.0
        %v1373 = vsel %vm1371, %v1364, 0.0
        %v1374 = vadd.f32 %v1372, %v1373
        %v1375 = vsel %vm1371, %v1365, 0.0
        %v1376 = vadd.f32 %v1374, %v1375
        %v1377 = vsel %vm1371, %v1366, 0.0
        %v1378 = vadd.f32 %v1376, %v1377
        %v1379 = vsel %vm1371, %v1367, 0.0
        %v1380 = vadd.f32 %v1378, %v1379
        %v1381 = vsel %vm1371, %v1368, 0.0
        %v1382 = vadd.f32 %v1380, %v1381
        %v1383 = vsel %vm1371, %v1369, 0.0
        %v1384 = vadd.f32 %v1382, %v1383
        %v1385 = vsel %vm1371, %v1370, 0.0
        %v1386 = vadd.f32 %v1384, %v1385
        %v1387 = vrot.slane %v1386, 4
        %v1388 = vadd.f32 %v1386, %v1387
        %v1389 = vrot.slane %v1388, 2
        %v1390 = vadd.f32 %v1388, %v1389
        %v1391 = vrot.slane %v1390, 1
        %v1392 = vadd.f32 %v1390, %v1391
        %1394 = vset.pattern.permute.xlu0 0
        %1395 = vperm.xlu0 %1394, %v1053
        %v1396 = vpop.permute.xlu0 %1395
        %1399 = vset.pattern.permute.xlu0 0
        %1400 = vperm.xlu0 %1399, %v1054
        %v1401 = vpop.permute.xlu0 %1400
        %1404 = vset.pattern.permute.xlu0 0
        %1405 = vperm.xlu0 %1404, %v1055
        %v1406 = vpop.permute.xlu0 %1405
        %1409 = vset.pattern.permute.xlu0 0
        %1410 = vperm.xlu0 %1409, %v1056
        %v1411 = vpop.permute.xlu0 %1410
        %1414 = vset.pattern.permute.xlu0 0
        %1415 = vperm.xlu0 %1414, %v1057
        %v1416 = vpop.permute.xlu0 %1415
        %1419 = vset.pattern.permute.xlu0 0
        %1420 = vperm.xlu0 %1419, %v1058
        %v1421 = vpop.permute.xlu0 %1420
        %1424 = vset.pattern.permute.xlu0 0
        %1425 = vperm.xlu0 %1424, %v1059
        %v1426 = vpop.permute.xlu0 %1425
        %1429 = vset.pattern.permute.xlu0 0
        %1430 = vperm.xlu0 %1429, %v1060
        %v1431 = vpop.permute.xlu0 %1430
        %v1433 = vmul.f32 %v762, %v1396
        %v1434 = vmul.f32 %v763, %v1401
        %v1435 = vmul.f32 %v764, %v1406
        %v1436 = vmul.f32 %v765, %v1411
        %v1437 = vmul.f32 %v766, %v1416
        %v1438 = vmul.f32 %v767, %v1421
        %v1439 = vmul.f32 %v768, %v1426
        %v1440 = vmul.f32 %v769, %v1431
        %v1441 = vsel %vm1371, %v1433, 0.0
        %v1442 = vsel %vm1371, %v1434, 0.0
        %v1443 = vadd.f32 %v1441, %v1442
        %v1444 = vsel %vm1371, %v1435, 0.0
        %v1445 = vadd.f32 %v1443, %v1444
        %v1446 = vsel %vm1371, %v1436, 0.0
        %v1447 = vadd.f32 %v1445, %v1446
        %v1448 = vsel %vm1371, %v1437, 0.0
        %v1449 = vadd.f32 %v1447, %v1448
        %v1450 = vsel %vm1371, %v1438, 0.0
        %v1451 = vadd.f32 %v1449, %v1450
        %v1452 = vsel %vm1371, %v1439, 0.0
        %v1453 = vadd.f32 %v1451, %v1452
        %v1454 = vsel %vm1371, %v1440, 0.0
        %v1455 = vadd.f32 %v1453, %v1454
        %v1456 = vrot.slane %v1455, 4
        %v1457 = vadd.f32 %v1455, %v1456
        %v1458 = vrot.slane %v1457, 2
        %v1459 = vadd.f32 %v1457, %v1458
        %v1460 = vrot.slane %v1459, 1
        %v1461 = vadd.f32 %v1459, %v1460
        %1463 = vset.pattern.permute.xlu0 0
        %1464 = vperm.xlu0 %1463, %v1184
        %v1465 = vpop.permute.xlu0 %1464
        %1468 = vset.pattern.permute.xlu0 0
        %1469 = vperm.xlu0 %1468, %v1185
        %v1470 = vpop.permute.xlu0 %1469
        %1473 = vset.pattern.permute.xlu0 0
        %1474 = vperm.xlu0 %1473, %v1186
        %v1475 = vpop.permute.xlu0 %1474
        %1478 = vset.pattern.permute.xlu0 0
        %1479 = vperm.xlu0 %1478, %v1187
        %v1480 = vpop.permute.xlu0 %1479
        %1483 = vset.pattern.permute.xlu0 0
        %1484 = vperm.xlu0 %1483, %v1188
        %v1485 = vpop.permute.xlu0 %1484
        %1488 = vset.pattern.permute.xlu0 0
        %1489 = vperm.xlu0 %1488, %v1189
        %v1490 = vpop.permute.xlu0 %1489
        %1493 = vset.pattern.permute.xlu0 0
        %1494 = vperm.xlu0 %1493, %v1190
        %v1495 = vpop.permute.xlu0 %1494
        %1498 = vset.pattern.permute.xlu0 0
        %1499 = vperm.xlu0 %1498, %v1191
        %v1500 = vpop.permute.xlu0 %1499
        %v1502 = vmul.f32 %v762, %v1465
        %v1503 = vmul.f32 %v763, %v1470
        %v1504 = vmul.f32 %v764, %v1475
        %v1505 = vmul.f32 %v765, %v1480
        %v1506 = vmul.f32 %v766, %v1485
        %v1507 = vmul.f32 %v767, %v1490
        %v1508 = vmul.f32 %v768, %v1495
        %v1509 = vmul.f32 %v769, %v1500
        %v1510 = vsel %vm1371, %v1502, 0.0
        %v1511 = vsel %vm1371, %v1503, 0.0
        %v1512 = vadd.f32 %v1510, %v1511
        %v1513 = vsel %vm1371, %v1504, 0.0
        %v1514 = vadd.f32 %v1512, %v1513
        %v1515 = vsel %vm1371, %v1505, 0.0
        %v1516 = vadd.f32 %v1514, %v1515
        %v1517 = vsel %vm1371, %v1506, 0.0
        %v1518 = vadd.f32 %v1516, %v1517
        %v1519 = vsel %vm1371, %v1507, 0.0
        %v1520 = vadd.f32 %v1518, %v1519
        %v1521 = vsel %vm1371, %v1508, 0.0
        %v1522 = vadd.f32 %v1520, %v1521
        %v1523 = vsel %vm1371, %v1509, 0.0
        %v1524 = vadd.f32 %v1522, %v1523
        %v1525 = vrot.slane %v1524, 4
        %v1526 = vadd.f32 %v1524, %v1525
        %v1527 = vrot.slane %v1526, 2
        %v1528 = vadd.f32 %v1526, %v1527
        %v1529 = vrot.slane %v1528, 1
        %v1530 = vadd.f32 %v1528, %v1529
        %1532 = vset.pattern.permute.xlu0 0
        %1533 = vperm.xlu0 %1532, %v1315
        %v1534 = vpop.permute.xlu0 %1533
        %1537 = vset.pattern.permute.xlu0 0
        %1538 = vperm.xlu0 %1537, %v1316
        %v1539 = vpop.permute.xlu0 %1538
        %1542 = vset.pattern.permute.xlu0 0
        %1543 = vperm.xlu0 %1542, %v1317
        %v1544 = vpop.permute.xlu0 %1543
        %1547 = vset.pattern.permute.xlu0 0
        %1548 = vperm.xlu0 %1547, %v1318
        %v1549 = vpop.permute.xlu0 %1548
        %1552 = vset.pattern.permute.xlu0 0
        %1553 = vperm.xlu0 %1552, %v1319
        %v1554 = vpop.permute.xlu0 %1553
        %1557 = vset.pattern.permute.xlu0 0
        %1558 = vperm.xlu0 %1557, %v1320
        %v1559 = vpop.permute.xlu0 %1558
        %1562 = vset.pattern.permute.xlu0 0
        %1563 = vperm.xlu0 %1562, %v1321
        %v1564 = vpop.permute.xlu0 %1563
        %1567 = vset.pattern.permute.xlu0 0
        %1568 = vperm.xlu0 %1567, %v1322
        %v1569 = vpop.permute.xlu0 %1568
        %v1571 = vmul.f32 %v762, %v1534
        %v1572 = vmul.f32 %v763, %v1539
        %v1573 = vmul.f32 %v764, %v1544
        %v1574 = vmul.f32 %v765, %v1549
        %v1575 = vmul.f32 %v766, %v1554
        %v1576 = vmul.f32 %v767, %v1559
        %v1577 = vmul.f32 %v768, %v1564
        %v1578 = vmul.f32 %v769, %v1569
        %v1579 = vsel %vm1371, %v1571, 0.0
        %v1580 = vsel %vm1371, %v1572, 0.0
        %v1581 = vadd.f32 %v1579, %v1580
        %v1582 = vsel %vm1371, %v1573, 0.0
        %v1583 = vadd.f32 %v1581, %v1582
        %v1584 = vsel %vm1371, %v1574, 0.0
        %v1585 = vadd.f32 %v1583, %v1584
        %v1586 = vsel %vm1371, %v1575, 0.0
        %v1587 = vadd.f32 %v1585, %v1586
        %v1588 = vsel %vm1371, %v1576, 0.0
        %v1589 = vadd.f32 %v1587, %v1588
        %v1590 = vsel %vm1371, %v1577, 0.0
        %v1591 = vadd.f32 %v1589, %v1590
        %v1592 = vsel %vm1371, %v1578, 0.0
        %v1593 = vadd.f32 %v1591, %v1592
        %v1594 = vrot.slane %v1593, 4
        %v1595 = vadd.f32 %v1593, %v1594
        %v1596 = vrot.slane %v1595, 2
        %v1597 = vadd.f32 %v1595, %v1596
        %v1598 = vrot.slane %v1597, 1
        %v1599 = vadd.f32 %v1597, %v1598
        %v1600 = vmul.f32 %v771, %v1326
        %v1601 = vmul.f32 %v772, %v1331
        %v1602 = vmul.f32 %v773, %v1336
        %v1603 = vmul.f32 %v774, %v1341
        %v1604 = vmul.f32 %v775, %v1346
        %v1605 = vmul.f32 %v776, %v1351
        %v1606 = vmul.f32 %v777, %v1356
        %v1607 = vmul.f32 %v778, %v1361
        %v1608 = vsel %vm1371, %v1600, 0.0
        %v1609 = vsel %vm1371, %v1601, 0.0
        %v1610 = vadd.f32 %v1608, %v1609
        %v1611 = vsel %vm1371, %v1602, 0.0
        %v1612 = vadd.f32 %v1610, %v1611
        %v1613 = vsel %vm1371, %v1603, 0.0
        %v1614 = vadd.f32 %v1612, %v1613
        %v1615 = vsel %vm1371, %v1604, 0.0
        %v1616 = vadd.f32 %v1614, %v1615
        %v1617 = vsel %vm1371, %v1605, 0.0
        %v1618 = vadd.f32 %v1616, %v1617
        %v1619 = vsel %vm1371, %v1606, 0.0
        %v1620 = vadd.f32 %v1618, %v1619
        %v1621 = vsel %vm1371, %v1607, 0.0
        %v1622 = vadd.f32 %v1620, %v1621
        %v1623 = vrot.slane %v1622, 4
        %v1624 = vadd.f32 %v1622, %v1623
        %v1625 = vrot.slane %v1624, 2
        %v1626 = vadd.f32 %v1624, %v1625
        %v1627 = vrot.slane %v1626, 1
        %v1628 = vadd.f32 %v1626, %v1627
        %v1629 = vmul.f32 %v771, %v1396
        %v1630 = vmul.f32 %v772, %v1401
        %v1631 = vmul.f32 %v773, %v1406
        %v1632 = vmul.f32 %v774, %v1411
        %v1633 = vmul.f32 %v775, %v1416
        %v1634 = vmul.f32 %v776, %v1421
        %v1635 = vmul.f32 %v777, %v1426
        %v1636 = vmul.f32 %v778, %v1431
        %v1637 = vsel %vm1371, %v1629, 0.0
        %v1638 = vsel %vm1371, %v1630, 0.0
        %v1639 = vadd.f32 %v1637, %v1638
        %v1640 = vsel %vm1371, %v1631, 0.0
        %v1641 = vadd.f32 %v1639, %v1640
        %v1642 = vsel %vm1371, %v1632, 0.0
        %v1643 = vadd.f32 %v1641, %v1642
        %v1644 = vsel %vm1371, %v1633, 0.0
        %v1645 = vadd.f32 %v1643, %v1644
        %v1646 = vsel %vm1371, %v1634, 0.0
        %v1647 = vadd.f32 %v1645, %v1646
        %v1648 = vsel %vm1371, %v1635, 0.0
        %v1649 = vadd.f32 %v1647, %v1648
        %v1650 = vsel %vm1371, %v1636, 0.0
        %v1651 = vadd.f32 %v1649, %v1650
        %v1652 = vrot.slane %v1651, 4
        %v1653 = vadd.f32 %v1651, %v1652
        %v1654 = vrot.slane %v1653, 2
        %v1655 = vadd.f32 %v1653, %v1654
        %v1656 = vrot.slane %v1655, 1
        %v1657 = vadd.f32 %v1655, %v1656
        %v1658 = vmul.f32 %v771, %v1465
        %v1659 = vmul.f32 %v772, %v1470
        %v1660 = vmul.f32 %v773, %v1475
        %v1661 = vmul.f32 %v774, %v1480
        %v1662 = vmul.f32 %v775, %v1485
        %v1663 = vmul.f32 %v776, %v1490
        %v1664 = vmul.f32 %v777, %v1495
        %v1665 = vmul.f32 %v778, %v1500
        %v1666 = vsel %vm1371, %v1658, 0.0
        %v1667 = vsel %vm1371, %v1659, 0.0
        %v1668 = vadd.f32 %v1666, %v1667
        %v1669 = vsel %vm1371, %v1660, 0.0
        %v1670 = vadd.f32 %v1668, %v1669
        %v1671 = vsel %vm1371, %v1661, 0.0
        %v1672 = vadd.f32 %v1670, %v1671
        %v1673 = vsel %vm1371, %v1662, 0.0
        %v1674 = vadd.f32 %v1672, %v1673
        %v1675 = vsel %vm1371, %v1663, 0.0
        %v1676 = vadd.f32 %v1674, %v1675
        %v1677 = vsel %vm1371, %v1664, 0.0
        %v1678 = vadd.f32 %v1676, %v1677
        %v1679 = vsel %vm1371, %v1665, 0.0
        %v1680 = vadd.f32 %v1678, %v1679
        %v1681 = vrot.slane %v1680, 4
        %v1682 = vadd.f32 %v1680, %v1681
        %v1683 = vrot.slane %v1682, 2
        %v1684 = vadd.f32 %v1682, %v1683
        %v1685 = vrot.slane %v1684, 1
        %v1686 = vadd.f32 %v1684, %v1685
        %v1687 = vmul.f32 %v771, %v1534
        %v1688 = vmul.f32 %v772, %v1539
        %v1689 = vmul.f32 %v773, %v1544
        %v1690 = vmul.f32 %v774, %v1549
        %v1691 = vmul.f32 %v775, %v1554
        %v1692 = vmul.f32 %v776, %v1559
        %v1693 = vmul.f32 %v777, %v1564
        %v1694 = vmul.f32 %v778, %v1569
        %v1695 = vsel %vm1371, %v1687, 0.0
        %v1696 = vsel %vm1371, %v1688, 0.0
        %v1697 = vadd.f32 %v1695, %v1696
        %v1698 = vsel %vm1371, %v1689, 0.0
        %v1699 = vadd.f32 %v1697, %v1698
        %v1700 = vsel %vm1371, %v1690, 0.0
        %v1701 = vadd.f32 %v1699, %v1700
        %v1702 = vsel %vm1371, %v1691, 0.0
        %v1703 = vadd.f32 %v1701, %v1702
        %v1704 = vsel %vm1371, %v1692, 0.0
        %v1705 = vadd.f32 %v1703, %v1704
        %v1706 = vsel %vm1371, %v1693, 0.0
        %v1707 = vadd.f32 %v1705, %v1706
        %v1708 = vsel %vm1371, %v1694, 0.0
        %v1709 = vadd.f32 %v1707, %v1708
        %v1710 = vrot.slane %v1709, 4
        %v1711 = vadd.f32 %v1709, %v1710
        %v1712 = vrot.slane %v1711, 2
        %v1713 = vadd.f32 %v1711, %v1712
        %v1714 = vrot.slane %v1713, 1
        %v1715 = vadd.f32 %v1713, %v1714
        %v1716 = vmul.f32 %v780, %v1326
        %v1717 = vmul.f32 %v781, %v1331
        %v1718 = vmul.f32 %v782, %v1336
        %v1719 = vmul.f32 %v783, %v1341
        %v1720 = vmul.f32 %v784, %v1346
        %v1721 = vmul.f32 %v785, %v1351
        %v1722 = vmul.f32 %v786, %v1356
        %v1723 = vmul.f32 %v787, %v1361
        %v1724 = vsel %vm1371, %v1716, 0.0
        %v1725 = vsel %vm1371, %v1717, 0.0
        %v1726 = vadd.f32 %v1724, %v1725
        %v1727 = vsel %vm1371, %v1718, 0.0
        %v1728 = vadd.f32 %v1726, %v1727
        %v1729 = vsel %vm1371, %v1719, 0.0
        %v1730 = vadd.f32 %v1728, %v1729
        %v1731 = vsel %vm1371, %v1720, 0.0
        %v1732 = vadd.f32 %v1730, %v1731
        %v1733 = vsel %vm1371, %v1721, 0.0
        %v1734 = vadd.f32 %v1732, %v1733
        %v1735 = vsel %vm1371, %v1722, 0.0
        %v1736 = vadd.f32 %v1734, %v1735
        %v1737 = vsel %vm1371, %v1723, 0.0
        %v1738 = vadd.f32 %v1736, %v1737
        %v1739 = vrot.slane %v1738, 4
        %v1740 = vadd.f32 %v1738, %v1739
        %v1741 = vrot.slane %v1740, 2
        %v1742 = vadd.f32 %v1740, %v1741
        %v1743 = vrot.slane %v1742, 1
        %v1744 = vadd.f32 %v1742, %v1743
        %v1745 = vmul.f32 %v780, %v1396
        %v1746 = vmul.f32 %v781, %v1401
        %v1747 = vmul.f32 %v782, %v1406
        %v1748 = vmul.f32 %v783, %v1411
        %v1749 = vmul.f32 %v784, %v1416
        %v1750 = vmul.f32 %v785, %v1421
        %v1751 = vmul.f32 %v786, %v1426
        %v1752 = vmul.f32 %v787, %v1431
        %v1753 = vsel %vm1371, %v1745, 0.0
        %v1754 = vsel %vm1371, %v1746, 0.0
        %v1755 = vadd.f32 %v1753, %v1754
        %v1756 = vsel %vm1371, %v1747, 0.0
        %v1757 = vadd.f32 %v1755, %v1756
        %v1758 = vsel %vm1371, %v1748, 0.0
        %v1759 = vadd.f32 %v1757, %v1758
        %v1760 = vsel %vm1371, %v1749, 0.0
        %v1761 = vadd.f32 %v1759, %v1760
        %v1762 = vsel %vm1371, %v1750, 0.0
        %v1763 = vadd.f32 %v1761, %v1762
        %v1764 = vsel %vm1371, %v1751, 0.0
        %v1765 = vadd.f32 %v1763, %v1764
        %v1766 = vsel %vm1371, %v1752, 0.0
        %v1767 = vadd.f32 %v1765, %v1766
        %v1768 = vrot.slane %v1767, 4
        %v1769 = vadd.f32 %v1767, %v1768
        %v1770 = vrot.slane %v1769, 2
        %v1771 = vadd.f32 %v1769, %v1770
        %v1772 = vrot.slane %v1771, 1
        %v1773 = vadd.f32 %v1771, %v1772
        %v1774 = vmul.f32 %v780, %v1465
        %v1775 = vmul.f32 %v781, %v1470
        %v1776 = vmul.f32 %v782, %v1475
        %v1777 = vmul.f32 %v783, %v1480
        %v1778 = vmul.f32 %v784, %v1485
        %v1779 = vmul.f32 %v785, %v1490
        %v1780 = vmul.f32 %v786, %v1495
        %v1781 = vmul.f32 %v787, %v1500
        %v1782 = vsel %vm1371, %v1774, 0.0
        %v1783 = vsel %vm1371, %v1775, 0.0
        %v1784 = vadd.f32 %v1782, %v1783
        %v1785 = vsel %vm1371, %v1776, 0.0
        %v1786 = vadd.f32 %v1784, %v1785
        %v1787 = vsel %vm1371, %v1777, 0.0
        %v1788 = vadd.f32 %v1786, %v1787
        %v1789 = vsel %vm1371, %v1778, 0.0
        %v1790 = vadd.f32 %v1788, %v1789
        %v1791 = vsel %vm1371, %v1779, 0.0
        %v1792 = vadd.f32 %v1790, %v1791
        %v1793 = vsel %vm1371, %v1780, 0.0
        %v1794 = vadd.f32 %v1792, %v1793
        %v1795 = vsel %vm1371, %v1781, 0.0
        %v1796 = vadd.f32 %v1794, %v1795
        %v1797 = vrot.slane %v1796, 4
        %v1798 = vadd.f32 %v1796, %v1797
        %v1799 = vrot.slane %v1798, 2
        %v1800 = vadd.f32 %v1798, %v1799
        %v1801 = vrot.slane %v1800, 1
        %v1802 = vadd.f32 %v1800, %v1801
        %v1803 = vmul.f32 %v780, %v1534
        %v1804 = vmul.f32 %v781, %v1539
        %v1805 = vmul.f32 %v782, %v1544
        %v1806 = vmul.f32 %v783, %v1549
        %v1807 = vmul.f32 %v784, %v1554
        %v1808 = vmul.f32 %v785, %v1559
        %v1809 = vmul.f32 %v786, %v1564
        %v1810 = vmul.f32 %v787, %v1569
        %v1811 = vsel %vm1371, %v1803, 0.0
        %v1812 = vsel %vm1371, %v1804, 0.0
        %v1813 = vadd.f32 %v1811, %v1812
        %v1814 = vsel %vm1371, %v1805, 0.0
        %v1815 = vadd.f32 %v1813, %v1814
        %v1816 = vsel %vm1371, %v1806, 0.0
        %v1817 = vadd.f32 %v1815, %v1816
        %v1818 = vsel %vm1371, %v1807, 0.0
        %v1819 = vadd.f32 %v1817, %v1818
        %v1820 = vsel %vm1371, %v1808, 0.0
        %v1821 = vadd.f32 %v1819, %v1820
        %v1822 = vsel %vm1371, %v1809, 0.0
        %v1823 = vadd.f32 %v1821, %v1822
        %v1824 = vsel %vm1371, %v1810, 0.0
        %v1825 = vadd.f32 %v1823, %v1824
        %v1826 = vrot.slane %v1825, 4
        %v1827 = vadd.f32 %v1825, %v1826
        %v1828 = vrot.slane %v1827, 2
        %v1829 = vadd.f32 %v1827, %v1828
        %v1830 = vrot.slane %v1829, 1
        %v1831 = vadd.f32 %v1829, %v1830
        %v1832 = vmul.f32 %v789, %v1326
        %v1833 = vmul.f32 %v790, %v1331
        %v1834 = vmul.f32 %v791, %v1336
        %v1835 = vmul.f32 %v792, %v1341
        %v1836 = vmul.f32 %v793, %v1346
        %v1837 = vmul.f32 %v794, %v1351
        %v1838 = vmul.f32 %v795, %v1356
        %v1839 = vmul.f32 %v796, %v1361
        %v1840 = vsel %vm1371, %v1832, 0.0
        %v1841 = vsel %vm1371, %v1833, 0.0
        %v1842 = vadd.f32 %v1840, %v1841
        %v1843 = vsel %vm1371, %v1834, 0.0
        %v1844 = vadd.f32 %v1842, %v1843
        %v1845 = vsel %vm1371, %v1835, 0.0
        %v1846 = vadd.f32 %v1844, %v1845
        %v1847 = vsel %vm1371, %v1836, 0.0
        %v1848 = vadd.f32 %v1846, %v1847
        %v1849 = vsel %vm1371, %v1837, 0.0
        %v1850 = vadd.f32 %v1848, %v1849
        %v1851 = vsel %vm1371, %v1838, 0.0
        %v1852 = vadd.f32 %v1850, %v1851
        %v1853 = vsel %vm1371, %v1839, 0.0
        %v1854 = vadd.f32 %v1852, %v1853
        %v1855 = vrot.slane %v1854, 4
        %v1856 = vadd.f32 %v1854, %v1855
        %v1857 = vrot.slane %v1856, 2
        %v1858 = vadd.f32 %v1856, %v1857
        %v1859 = vrot.slane %v1858, 1
        %v1860 = vadd.f32 %v1858, %v1859
        %v1861 = vmul.f32 %v789, %v1396
        %v1862 = vmul.f32 %v790, %v1401
        %v1863 = vmul.f32 %v791, %v1406
        %v1864 = vmul.f32 %v792, %v1411
        %v1865 = vmul.f32 %v793, %v1416
        %v1866 = vmul.f32 %v794, %v1421
        %v1867 = vmul.f32 %v795, %v1426
        %v1868 = vmul.f32 %v796, %v1431
        %v1869 = vsel %vm1371, %v1861, 0.0
        %v1870 = vsel %vm1371, %v1862, 0.0
        %v1871 = vadd.f32 %v1869, %v1870
        %v1872 = vsel %vm1371, %v1863, 0.0
        %v1873 = vadd.f32 %v1871, %v1872
        %v1874 = vsel %vm1371, %v1864, 0.0
        %v1875 = vadd.f32 %v1873, %v1874
        %v1876 = vsel %vm1371, %v1865, 0.0
        %v1877 = vadd.f32 %v1875, %v1876
        %v1878 = vsel %vm1371, %v1866, 0.0
        %v1879 = vadd.f32 %v1877, %v1878
        %v1880 = vsel %vm1371, %v1867, 0.0
        %v1881 = vadd.f32 %v1879, %v1880
        %v1882 = vsel %vm1371, %v1868, 0.0
        %v1883 = vadd.f32 %v1881, %v1882
        %v1884 = vrot.slane %v1883, 4
        %v1885 = vadd.f32 %v1883, %v1884
        %v1886 = vrot.slane %v1885, 2
        %v1887 = vadd.f32 %v1885, %v1886
        %v1888 = vrot.slane %v1887, 1
        %v1889 = vadd.f32 %v1887, %v1888
        %v1890 = vmul.f32 %v789, %v1465
        %v1891 = vmul.f32 %v790, %v1470
        %v1892 = vmul.f32 %v791, %v1475
        %v1893 = vmul.f32 %v792, %v1480
        %v1894 = vmul.f32 %v793, %v1485
        %v1895 = vmul.f32 %v794, %v1490
        %v1896 = vmul.f32 %v795, %v1495
        %v1897 = vmul.f32 %v796, %v1500
        %v1898 = vsel %vm1371, %v1890, 0.0
        %v1899 = vsel %vm1371, %v1891, 0.0
        %v1900 = vadd.f32 %v1898, %v1899
        %v1901 = vsel %vm1371, %v1892, 0.0
        %v1902 = vadd.f32 %v1900, %v1901
        %v1903 = vsel %vm1371, %v1893, 0.0
        %v1904 = vadd.f32 %v1902, %v1903
        %v1905 = vsel %vm1371, %v1894, 0.0
        %v1906 = vadd.f32 %v1904, %v1905
        %v1907 = vsel %vm1371, %v1895, 0.0
        %v1908 = vadd.f32 %v1906, %v1907
        %v1909 = vsel %vm1371, %v1896, 0.0
        %v1910 = vadd.f32 %v1908, %v1909
        %v1911 = vsel %vm1371, %v1897, 0.0
        %v1912 = vadd.f32 %v1910, %v1911
        %v1913 = vrot.slane %v1912, 4
        %v1914 = vadd.f32 %v1912, %v1913
        %v1915 = vrot.slane %v1914, 2
        %v1916 = vadd.f32 %v1914, %v1915
        %v1917 = vrot.slane %v1916, 1
        %v1918 = vadd.f32 %v1916, %v1917
        %v1919 = vmul.f32 %v789, %v1534
        %v1920 = vmul.f32 %v790, %v1539
        %v1921 = vmul.f32 %v791, %v1544
        %v1922 = vmul.f32 %v792, %v1549
        %v1923 = vmul.f32 %v793, %v1554
        %v1924 = vmul.f32 %v794, %v1559
        %v1925 = vmul.f32 %v795, %v1564
        %v1926 = vmul.f32 %v796, %v1569
        %v1927 = vsel %vm1371, %v1919, 0.0
        %v1928 = vsel %vm1371, %v1920, 0.0
        %v1929 = vadd.f32 %v1927, %v1928
        %v1930 = vsel %vm1371, %v1921, 0.0
        %v1931 = vadd.f32 %v1929, %v1930
        %v1932 = vsel %vm1371, %v1922, 0.0
        %v1933 = vadd.f32 %v1931, %v1932
        %v1934 = vsel %vm1371, %v1923, 0.0
        %v1935 = vadd.f32 %v1933, %v1934
        %v1936 = vsel %vm1371, %v1924, 0.0
        %v1937 = vadd.f32 %v1935, %v1936
        %v1938 = vsel %vm1371, %v1925, 0.0
        %v1939 = vadd.f32 %v1937, %v1938
        %v1940 = vsel %vm1371, %v1926, 0.0
        %v1941 = vadd.f32 %v1939, %v1940
        %v1942 = vrot.slane %v1941, 4
        %v1943 = vadd.f32 %v1941, %v1942
        %v1944 = vrot.slane %v1943, 2
        %v1945 = vadd.f32 %v1943, %v1944
        %v1946 = vrot.slane %v1945, 1
        %v1947 = vadd.f32 %v1945, %v1946
        %v1948 = vadd.f32 %v1392, 0.0
        %v1949 = vadd.f32 %v1948, %v1657
        %v1950 = vadd.f32 %v1949, %v1802
        %v1951 = vadd.f32 %v1950, %v1947
        %v1952 = vadd.f32 %v1951, %v797
        %v1953 = vadd.f32 %v1461, 0.0
        %v1954 = vadd.f32 %v1953, %v1686
        %v1955 = vadd.f32 %v1954, %v1831
        %v1956 = vadd.f32 %v1955, %v1860
        %v1957 = vadd.f32 %v1956, %v797
        %v1958 = vadd.f32 %v1530, 0.0
        %v1959 = vadd.f32 %v1958, %v1715
        %v1960 = vadd.f32 %v1959, %v1744
        %v1961 = vadd.f32 %v1960, %v1889
        %v1962 = vadd.f32 %v1961, %v797
        %v1963 = vadd.f32 %v1599, 0.0
        %v1964 = vadd.f32 %v1963, %v1628
        %v1965 = vadd.f32 %v1964, %v1773
        %v1966 = vadd.f32 %v1965, %v1918
        %v1967 = vadd.f32 %v1966, %v797
        %v1968 = vmax.f32 %v1952, %v1957
        %v1969 = vmax.f32 %v1968, %v1962
        %v1970 = vmax.f32 %v1969, %v1967
        %v1971 = vsub.f32 %v1952, %v1970
        %v1972 = vmul.f32 %v1971, 1.442695
        %v1973 = vpow.pop %v1972
        %v1974 = vsub.f32 %v1957, %v1970
        %v1975 = vmul.f32 %v1974, 1.442695
        %v1976 = vpow.pop %v1975
        %v1977 = vsub.f32 %v1962, %v1970
        %v1978 = vmul.f32 %v1977, 1.442695
        %v1979 = vpow.pop %v1978
        %v1980 = vsub.f32 %v1967, %v1970
        %v1981 = vmul.f32 %v1980, 1.442695
        %v1982 = vpow.pop %v1981
        %v1983 = vadd.f32 %v1973, %v1976
        %v1984 = vadd.f32 %v1983, %v1979
        %v1985 = vadd.f32 %v1984, %v1982
        %v1986 = vmul.f32 %v1973, 4.0
        %v1987 = vrcp.pop %v1985
        %v1988 = vmul.f32 %v1986, %v1987
        %v1989 = vmul.f32 %v1976, 4.0
        %v1990 = vmul.f32 %v1989, %v1987
        %v1991 = vmul.f32 %v1979, 4.0
        %v1992 = vmul.f32 %v1991, %v1987
        %v1993 = vmul.f32 %v1982, 4.0
        %v1994 = vmul.f32 %v1993, %v1987
        %v1995 = vlaneseq
        %v1996 = vshrl.u32 %v1995, 7
        %v1997 = vadd.s32 %v1996, 8
        %v1998 = vadd.s32 %v1996, 16
        %v1999 = vadd.s32 %v1996, 24
        %v2000 = vadd.s32 %v1996, 32
        %v2001 = vadd.s32 %v1996, 40
        %v2002 = vadd.s32 %v1996, 48
        %v2003 = vadd.s32 %v1996, 56
        %v2004 = vlaneseq
        %v2005 = vand.u32 %v2004, 127
        %vm2006 = vcmp.eq.s32.totalorder %v1996, %v2005
        %vm2007 = vcmp.eq.s32.totalorder %v1997, %v2005
        %vm2008 = vcmp.eq.s32.totalorder %v1998, %v2005
        %vm2009 = vcmp.eq.s32.totalorder %v1999, %v2005
        %vm2010 = vcmp.eq.s32.totalorder %v2000, %v2005
        %vm2011 = vcmp.eq.s32.totalorder %v2001, %v2005
        %vm2012 = vcmp.eq.s32.totalorder %v2002, %v2005
        %vm2013 = vcmp.eq.s32.totalorder %v2003, %v2005
        %v2014 = vsel %vm2006, 1, 0
        %v2015 = vsel %vm2007, 1, 0
        %v2016 = vsel %vm2008, 1, 0
        %v2017 = vsel %vm2009, 1, 0
        %v2018 = vsel %vm2010, 1, 0
        %v2019 = vsel %vm2011, 1, 0
        %v2020 = vsel %vm2012, 1, 0
        %v2021 = vsel %vm2013, 1, 0
        %v2022 = vcvt.s32.f32 %v2014
        %v2023 = vcvt.s32.f32 %v2015
        %v2024 = vcvt.s32.f32 %v2016
        %v2025 = vcvt.s32.f32 %v2017
        %v2026 = vcvt.s32.f32 %v2018
        %v2027 = vcvt.s32.f32 %v2019
        %v2028 = vcvt.s32.f32 %v2020
        %v2029 = vcvt.s32.f32 %v2021
        %v2030 = vlaneseq
        %v2031 = vshrl.u32 %v2030, 7
        %v2032 = vsub.s32 0, %v2031
        %v2033 = vrot.slane %v1988, %v2032
        %v2034 = vmul.f32 %v2022, %v2033
        %v2035 = vmul.f32 %v2023, %v2033
        %v2036 = vmul.f32 %v2024, %v2033
        %v2037 = vmul.f32 %v2025, %v2033
        %v2038 = vmul.f32 %v2026, %v2033
        %v2039 = vmul.f32 %v2027, %v2033
        %v2040 = vmul.f32 %v2028, %v2033
        %v2041 = vmul.f32 %v2029, %v2033
        %v2042 = vsel %vm1371, %v2034, 0.0
        %2043 = vadd.xlane.f32.xlu0 %v2042
        %v2044 = vpop.xlane.xlu0 %2043
        %v2045 = vsel %vm1371, %v2035, 0.0
        %2046 = vadd.xlane.f32.xlu0 %v2045
        %v2047 = vpop.xlane.xlu0 %2046
        %v2048 = vsel %vm1371, %v2036, 0.0
        %2049 = vadd.xlane.f32.xlu0 %v2048
        %v2050 = vpop.xlane.xlu0 %2049
        %v2051 = vsel %vm1371, %v2037, 0.0
        %2052 = vadd.xlane.f32.xlu0 %v2051
        %v2053 = vpop.xlane.xlu0 %2052
        %v2054 = vsel %vm1371, %v2038, 0.0
        %2055 = vadd.xlane.f32.xlu0 %v2054
        %v2056 = vpop.xlane.xlu0 %2055
        %v2057 = vsel %vm1371, %v2039, 0.0
        %2058 = vadd.xlane.f32.xlu0 %v2057
        %v2059 = vpop.xlane.xlu0 %2058
        %v2060 = vsel %vm1371, %v2040, 0.0
        %2061 = vadd.xlane.f32.xlu0 %v2060
        %v2062 = vpop.xlane.xlu0 %2061
        %v2063 = vsel %vm1371, %v2041, 0.0
        %2064 = vadd.xlane.f32.xlu0 %v2063
        %v2065 = vpop.xlane.xlu0 %2064
        %v2066 = vlaneseq
        %v2067 = vshrl.u32 %v2066, 7
        %v2068 = vsub.s32 0, %v2067
        %v2069 = vrot.slane %v1990, %v2068
        %v2070 = vmul.f32 %v2022, %v2069
        %v2071 = vmul.f32 %v2023, %v2069
        %v2072 = vmul.f32 %v2024, %v2069
        %v2073 = vmul.f32 %v2025, %v2069
        %v2074 = vmul.f32 %v2026, %v2069
        %v2075 = vmul.f32 %v2027, %v2069
        %v2076 = vmul.f32 %v2028, %v2069
        %v2077 = vmul.f32 %v2029, %v2069
        %v2078 = vsel %vm1371, %v2070, 0.0
        %2079 = vadd.xlane.f32.xlu0 %v2078
        %v2080 = vpop.xlane.xlu0 %2079
        %v2081 = vsel %vm1371, %v2071, 0.0
        %2082 = vadd.xlane.f32.xlu0 %v2081
        %v2083 = vpop.xlane.xlu0 %2082
        %v2084 = vsel %vm1371, %v2072, 0.0
        %2085 = vadd.xlane.f32.xlu0 %v2084
        %v2086 = vpop.xlane.xlu0 %2085
        %v2087 = vsel %vm1371, %v2073, 0.0
        %2088 = vadd.xlane.f32.xlu0 %v2087
        %v2089 = vpop.xlane.xlu0 %2088
        %v2090 = vsel %vm1371, %v2074, 0.0
        %2091 = vadd.xlane.f32.xlu0 %v2090
        %v2092 = vpop.xlane.xlu0 %2091
        %v2093 = vsel %vm1371, %v2075, 0.0
        %2094 = vadd.xlane.f32.xlu0 %v2093
        %v2095 = vpop.xlane.xlu0 %2094
        %v2096 = vsel %vm1371, %v2076, 0.0
        %2097 = vadd.xlane.f32.xlu0 %v2096
        %v2098 = vpop.xlane.xlu0 %2097
        %v2099 = vsel %vm1371, %v2077, 0.0
        %2100 = vadd.xlane.f32.xlu0 %v2099
        %v2101 = vpop.xlane.xlu0 %2100
        %v2102 = vlaneseq
        %v2103 = vshrl.u32 %v2102, 7
        %v2104 = vsub.s32 0, %v2103
        %v2105 = vrot.slane %v1992, %v2104
        %v2106 = vmul.f32 %v2022, %v2105
        %v2107 = vmul.f32 %v2023, %v2105
        %v2108 = vmul.f32 %v2024, %v2105
        %v2109 = vmul.f32 %v2025, %v2105
        %v2110 = vmul.f32 %v2026, %v2105
        %v2111 = vmul.f32 %v2027, %v2105
        %v2112 = vmul.f32 %v2028, %v2105
        %v2113 = vmul.f32 %v2029, %v2105
        %v2114 = vsel %vm1371, %v2106, 0.0
        %2115 = vadd.xlane.f32.xlu0 %v2114
        %v2116 = vpop.xlane.xlu0 %2115
        %v2117 = vsel %vm1371, %v2107, 0.0
        %2118 = vadd.xlane.f32.xlu0 %v2117
        %v2119 = vpop.xlane.xlu0 %2118
        %v2120 = vsel %vm1371, %v2108, 0.0
        %2121 = vadd.xlane.f32.xlu0 %v2120
        %v2122 = vpop.xlane.xlu0 %2121
        %v2123 = vsel %vm1371, %v2109, 0.0
        %2124 = vadd.xlane.f32.xlu0 %v2123
        %v2125 = vpop.xlane.xlu0 %2124
        %v2126 = vsel %vm1371, %v2110, 0.0
        %2127 = vadd.xlane.f32.xlu0 %v2126
        %v2128 = vpop.xlane.xlu0 %2127
        %v2129 = vsel %vm1371, %v2111, 0.0
        %2130 = vadd.xlane.f32.xlu0 %v2129
        %v2131 = vpop.xlane.xlu0 %2130
        %v2132 = vsel %vm1371, %v2112, 0.0
        %2133 = vadd.xlane.f32.xlu0 %v2132
        %v2134 = vpop.xlane.xlu0 %2133
        %v2135 = vsel %vm1371, %v2113, 0.0
        %2136 = vadd.xlane.f32.xlu0 %v2135
        %v2137 = vpop.xlane.xlu0 %2136
        %v2138 = vlaneseq
        %v2139 = vshrl.u32 %v2138, 7
        %v2140 = vsub.s32 0, %v2139
        %v2141 = vrot.slane %v1994, %v2140
        %v2142 = vmul.f32 %v2022, %v2141
        %v2143 = vmul.f32 %v2023, %v2141
        %v2144 = vmul.f32 %v2024, %v2141
        %v2145 = vmul.f32 %v2025, %v2141
        %v2146 = vmul.f32 %v2026, %v2141
        %v2147 = vmul.f32 %v2027, %v2141
        %v2148 = vmul.f32 %v2028, %v2141
        %v2149 = vmul.f32 %v2029, %v2141
        %v2150 = vsel %vm1371, %v2142, 0.0
        %2151 = vadd.xlane.f32.xlu0 %v2150
        %v2152 = vpop.xlane.xlu0 %2151
        %v2153 = vsel %vm1371, %v2143, 0.0
        %2154 = vadd.xlane.f32.xlu0 %v2153
        %v2155 = vpop.xlane.xlu0 %2154
        %v2156 = vsel %vm1371, %v2144, 0.0
        %2157 = vadd.xlane.f32.xlu0 %v2156
        %v2158 = vpop.xlane.xlu0 %2157
        %v2159 = vsel %vm1371, %v2145, 0.0
        %2160 = vadd.xlane.f32.xlu0 %v2159
        %v2161 = vpop.xlane.xlu0 %2160
        %v2162 = vsel %vm1371, %v2146, 0.0
        %2163 = vadd.xlane.f32.xlu0 %v2162
        %v2164 = vpop.xlane.xlu0 %2163
        %v2165 = vsel %vm1371, %v2147, 0.0
        %2166 = vadd.xlane.f32.xlu0 %v2165
        %v2167 = vpop.xlane.xlu0 %2166
        %v2168 = vsel %vm1371, %v2148, 0.0
        %2169 = vadd.xlane.f32.xlu0 %v2168
        %v2170 = vpop.xlane.xlu0 %2169
        %v2171 = vsel %vm1371, %v2149, 0.0
        %2172 = vadd.xlane.f32.xlu0 %v2171
        %v2173 = vpop.xlane.xlu0 %2172
        %v2174 = vmul.f32 %v458, %v2044
        %v2175 = vmul.f32 %v459, %v2044
        %v2176 = vmul.f32 %v460, %v2047
        %v2177 = vmul.f32 %v461, %v2047
        %v2178 = vmul.f32 %v462, %v2050
        %v2179 = vmul.f32 %v463, %v2050
        %v2180 = vmul.f32 %v464, %v2053
        %v2181 = vmul.f32 %v465, %v2053
        %v2182 = vmul.f32 %v466, %v2056
        %v2183 = vmul.f32 %v467, %v2056
        %v2184 = vmul.f32 %v468, %v2059
        %v2185 = vmul.f32 %v469, %v2059
        %v2186 = vmul.f32 %v470, %v2062
        %v2187 = vmul.f32 %v471, %v2062
        %v2188 = vmul.f32 %v472, %v2065
        %v2189 = vmul.f32 %v473, %v2065
        %v2190 = vmul.f32 %v506, %v2080
        %v2191 = vmul.f32 %v507, %v2080
        %v2192 = vmul.f32 %v508, %v2083
        %v2193 = vmul.f32 %v509, %v2083
        %v2194 = vmul.f32 %v510, %v2086
        %v2195 = vmul.f32 %v511, %v2086
        %v2196 = vmul.f32 %v512, %v2089
        %v2197 = vmul.f32 %v513, %v2089
        %v2198 = vmul.f32 %v514, %v2092
        %v2199 = vmul.f32 %v515, %v2092
        %v2200 = vmul.f32 %v516, %v2095
        %v2201 = vmul.f32 %v517, %v2095
        %v2202 = vmul.f32 %v518, %v2098
        %v2203 = vmul.f32 %v519, %v2098
        %v2204 = vmul.f32 %v520, %v2101
        %v2205 = vmul.f32 %v521, %v2101
        %v2206 = vadd.f32 %v2174, %v2190
        %v2207 = vadd.f32 %v2175, %v2191
        %v2208 = vadd.f32 %v2176, %v2192
        %v2209 = vadd.f32 %v2177, %v2193
        %v2210 = vadd.f32 %v2178, %v2194
        %v2211 = vadd.f32 %v2179, %v2195
        %v2212 = vadd.f32 %v2180, %v2196
        %v2213 = vadd.f32 %v2181, %v2197
        %v2214 = vadd.f32 %v2182, %v2198
        %v2215 = vadd.f32 %v2183, %v2199
        %v2216 = vadd.f32 %v2184, %v2200
        %v2217 = vadd.f32 %v2185, %v2201
        %v2218 = vadd.f32 %v2186, %v2202
        %v2219 = vadd.f32 %v2187, %v2203
        %v2220 = vadd.f32 %v2188, %v2204
        %v2221 = vadd.f32 %v2189, %v2205
        %v2222 = vmul.f32 %v554, %v2116
        %v2223 = vmul.f32 %v555, %v2116
        %v2224 = vmul.f32 %v556, %v2119
        %v2225 = vmul.f32 %v557, %v2119
        %v2226 = vmul.f32 %v558, %v2122
        %v2227 = vmul.f32 %v559, %v2122
        %v2228 = vmul.f32 %v560, %v2125
        %v2229 = vmul.f32 %v561, %v2125
        %v2230 = vmul.f32 %v562, %v2128
        %v2231 = vmul.f32 %v563, %v2128
        %v2232 = vmul.f32 %v564, %v2131
        %v2233 = vmul.f32 %v565, %v2131
        %v2234 = vmul.f32 %v566, %v2134
        %v2235 = vmul.f32 %v567, %v2134
        %v2236 = vmul.f32 %v568, %v2137
        %v2237 = vmul.f32 %v569, %v2137
        %v2238 = vadd.f32 %v2206, %v2222
        %v2239 = vadd.f32 %v2207, %v2223
        %v2240 = vadd.f32 %v2208, %v2224
        %v2241 = vadd.f32 %v2209, %v2225
        %v2242 = vadd.f32 %v2210, %v2226
        %v2243 = vadd.f32 %v2211, %v2227
        %v2244 = vadd.f32 %v2212, %v2228
        %v2245 = vadd.f32 %v2213, %v2229
        %v2246 = vadd.f32 %v2214, %v2230
        %v2247 = vadd.f32 %v2215, %v2231
        %v2248 = vadd.f32 %v2216, %v2232
        %v2249 = vadd.f32 %v2217, %v2233
        %v2250 = vadd.f32 %v2218, %v2234
        %v2251 = vadd.f32 %v2219, %v2235
        %v2252 = vadd.f32 %v2220, %v2236
        %v2253 = vadd.f32 %v2221, %v2237
        %v2254 = vmul.f32 %v602, %v2152
        %v2255 = vmul.f32 %v603, %v2152
        %v2256 = vmul.f32 %v604, %v2155
        %v2257 = vmul.f32 %v605, %v2155
        %v2258 = vmul.f32 %v606, %v2158
        %v2259 = vmul.f32 %v607, %v2158
        %v2260 = vmul.f32 %v608, %v2161
        %v2261 = vmul.f32 %v609, %v2161
        %v2262 = vmul.f32 %v610, %v2164
        %v2263 = vmul.f32 %v611, %v2164
        %v2264 = vmul.f32 %v612, %v2167
        %v2265 = vmul.f32 %v613, %v2167
        %v2266 = vmul.f32 %v614, %v2170
        %v2267 = vmul.f32 %v615, %v2170
        %v2268 = vmul.f32 %v616, %v2173
        %v2269 = vmul.f32 %v617, %v2173
        %v2270 = vadd.f32 %v2238, %v2254
        %v2271 = vadd.f32 %v2239, %v2255
        %v2272 = vadd.f32 %v2240, %v2256
        %v2273 = vadd.f32 %v2241, %v2257
        %v2274 = vadd.f32 %v2242, %v2258
        %v2275 = vadd.f32 %v2243, %v2259
        %v2276 = vadd.f32 %v2244, %v2260
        %v2277 = vadd.f32 %v2245, %v2261
        %v2278 = vadd.f32 %v2246, %v2262
        %v2279 = vadd.f32 %v2247, %v2263
        %v2280 = vadd.f32 %v2248, %v2264
        %v2281 = vadd.f32 %v2249, %v2265
        %v2282 = vadd.f32 %v2250, %v2266
        %v2283 = vadd.f32 %v2251, %v2267
        %v2284 = vadd.f32 %v2252, %v2268
        %v2285 = vadd.f32 %v2253, %v2269
        %2286 = vst [vmem:[%s447] sm:$0xff] %v2270
        %2287 = vst [vmem:[%s447 + $0x8] sm:$0xff] %v2271
        %2288 = vst [vmem:[%s447 + $0x10] sm:$0xff] %v2272
        %2289 = vst [vmem:[%s447 + $0x18] sm:$0xff] %v2273
        %2290 = vst [vmem:[%s447 + $0x20] sm:$0xff] %v2274
        %2291 = vst [vmem:[%s447 + $0x28] sm:$0xff] %v2275
        %2292 = vst [vmem:[%s447 + $0x30] sm:$0xff] %v2276
        %2293 = vst [vmem:[%s447 + $0x38] sm:$0xff] %v2277
        %2294 = vst [vmem:[%s447 + $0x40] sm:$0xff] %v2278
        %2295 = vst [vmem:[%s447 + $0x48] sm:$0xff] %v2279
        %2296 = vst [vmem:[%s447 + $0x50] sm:$0xff] %v2280
        %2297 = vst [vmem:[%s447 + $0x58] sm:$0xff] %v2281
        %2298 = vst [vmem:[%s447 + $0x60] sm:$0xff] %v2282
        %2299 = vst [vmem:[%s447 + $0x68] sm:$0xff] %v2283
        %2300 = vst [vmem:[%s447 + $0x70] sm:$0xff] %v2284
        %2301 = vst [vmem:[%s447 + $0x78] sm:$0xff] %v2285
        %s2302 = sand.u32 %s268, 1
        %s2303 = scalar_lea.sflag [#allocation4], %s2302
        %s2304 = sand.u32 %s268, 1
        %s2305 = smul.addr %s2304, 128
        %s2306 = scalar_lea.vmem [#allocation7], %s2305
        // Predicated region
        $region69: #{tpu_custom_call.1} parent=59 // pred_check
          %p2307 = pneg %p278
        $region70: #{tpu_custom_call.1} parent=59 // pred_check_branch
          %2309 = sbr.rel (%p2307) target = $region72
        $region71: #{tpu_custom_call.1} parent=59 // pred_region
          %s2311 = ssub.s32 2048, 2048
          %2312 = vsyncadd %s2303, %s2311
          %s2313 = smul.addr %s30, 16
          %s2314 = smul.addr %s2313, 128
          %s2315 = scalar_lea.hbm %s10, %s2314
          %s2316 = sshll.u32 %s2306, 4
          %s2317 = int_to_ptr.vmem [resolvable:$true] %s2316
          %2322 = dma.vmem_to_hbm [thread:$0]  %s2317, 2048, %s2315, %s2303, 256, 256, 16
        $region72: #{tpu_custom_call.1} parent=59 // pred_fallthru
          _
      $region60: #{tpu_custom_call.1} parent=5 // pred_fallthru
        _
      %p2323 = scmp.le.s32.totalorder 2, %s25
      // Predicated region
      $region73: #{tpu_custom_call.1} parent=5 // pred_check
        %p2324 = pneg %p2323
      $region74: #{tpu_custom_call.1} parent=5 // pred_check_branch
        %2326 = sbr.rel (%p2324) target = $region76
      $region75: #{tpu_custom_call.1} parent=5 // pred_region
        %s2327 = ssub.s32 %s25, 2
        // Predicated region
        $region77: #{tpu_custom_call.1} parent=75 // pred_check
          %p2328 = pneg %p284
        $region78: #{tpu_custom_call.1} parent=75 // pred_check_branch
          %2330 = sbr.rel (%p2328) target = $region80
        $region79: #{tpu_custom_call.1} parent=75 // pred_region
          %s2331 = sand.u32 %s269, 1
          %s2332 = scalar_lea.sflag [#allocation4], %s2331
          %s2333 = sand.u32 %s269, 1
          %s2334 = smul.addr %s2333, 128
          %s2335 = scalar_lea.vmem [#allocation7], %s2334
          %2336 = dma.done %s2332, 2048
        $region80: #{tpu_custom_call.1} parent=75 // pred_fallthru
          _
      $region76: #{tpu_custom_call.1} parent=5 // pred_fallthru
        _
    $region6: #{tpu_custom_call.1} parent=1 // loop_footer
      %s29 = sadd.s32 1, %s25
    $region7: #{tpu_custom_call.1} parent=1 // loop_footer_branch
      %24 = sbr.rel target = $region3
    $region8: #{tpu_custom_call.1} parent=1 // loop_exit
      _
    %2337 = vsyncpa [#allocation3], 1
    %s2338 = scalar_lea.sflag [#allocation3], 1
    %2339 = vsyncpa %s2338, 1
    %2340 = vsyncpa [#allocation6], 1
    %s2341 = scalar_lea.sflag [#allocation6], 1
    %2342 = vsyncpa %s2341, 1
    %2343 = vsyncpa [#allocation4], 1
    %s2344 = scalar_lea.sflag [#allocation4], 1
    %2345 = vsyncpa %s2344, 1

</llo_original>
